<compile_context>
chip_gen: v5e
topology: v5e:2x2
jax: 0.10.0
libtpu: 0.0.40
codegen_flags: <defaults>
</compile_context>

<pallas_src>
import functools

import jax
import jax.numpy as jnp
from jax.experimental import pallas as pl
from jax.experimental.pallas import tpu as pltpu

COMPUTE_DTYPE = jnp.bfloat16   # MXU operand dtype (f32 accumulation inside)
VMEM_LIMIT = 32 * 1024 * 1024
VMEM_BUDGET = 24 * 1024 * 1024  # conservative per-call block budget


def _round_up(x, m):
    return ((x + m - 1) // m) * m


def _pick_tm(M, per_row_bytes, resident_bytes, tm_max=512):
    """Largest M-tile (multiple of 16) whose double-buffered blocks fit VMEM."""
    tm = min(tm_max, _round_up(max(M, 1), 16))
    while tm > 16:
        if 2 * tm * per_row_bytes + resident_bytes <= VMEM_BUDGET:
            break
        tm = max(16, _round_up(tm // 2, 16))
    return tm


# --------------------------------------------------------------------------
# Pallas kernel 1: fused  out = relu?( A @ W + shift )
#   A: (tm, Kp) bf16, W: (Kp, Np) bf16 (BN scale already folded in),
#   shift: (1, Np) f32, out: (tm, Np).  Kp, Np are multiples of 128 so loads
#   and stores are unmasked full-lane vld/vst.
# --------------------------------------------------------------------------
def _fused_matmul_kernel(a_ref, w_ref, shift_ref, o_ref, *, apply_relu):
    acc = jnp.dot(a_ref[...], w_ref[...], preferred_element_type=jnp.float32)
    y = acc + shift_ref[...]
    if apply_relu:
        y = jnp.maximum(y, 0.0)
    o_ref[...] = y.astype(o_ref.dtype)


def fused_matmul(a, w_t, shift, *, relu, out_dtype, tm_max=512):
    """a: (M, K), w_t: (K, N), shift: (1, N)  ->  (M, N) in `out_dtype`."""
    M, K = a.shape
    Kw, N = w_t.shape
    assert Kw == K, (Kw, K)

    Kp = _round_up(K, 128)               # lane-aligned A loads
    Np = _round_up(N, 128)               # lane-dense output (no masked stores)

    in_b = jnp.dtype(a.dtype).itemsize
    w_b = jnp.dtype(w_t.dtype).itemsize
    out_b = jnp.dtype(out_dtype).itemsize
    per_row = Kp * in_b + Np * out_b                     # A row + out row (x2 dbl-buf)
    resident = 2 * (Kp * Np * w_b + Np * 4)              # W + shift (dbl-buf)
    tm = _pick_tm(M, per_row, resident, tm_max)
    Mp = _round_up(M, tm)

    if Mp != M or Kp != K:
        a = jnp.pad(a, ((0, Mp - M), (0, Kp - K)))
    if Kp != K or Np != N:
        w_t = jnp.pad(w_t, ((0, Kp - K), (0, Np - N)))
    if Np != N:
        shift = jnp.pad(shift, ((0, 0), (0, Np - N)))
    shift = shift.astype(jnp.float32)

    kern = functools.partial(_fused_matmul_kernel, apply_relu=relu)
    out = pl.pallas_call(
        kern,
        out_shape=jax.ShapeDtypeStruct((Mp, Np), out_dtype),
        grid=(pl.cdiv(Mp, tm),),
        in_specs=[
            pl.BlockSpec((tm, Kp), lambda i: (i, 0)),    # streamed over M
            pl.BlockSpec((Kp, Np), lambda i: (0, 0)),    # resident weights
            pl.BlockSpec((1, Np), lambda i: (0, 0)),     # resident shift
        ],
        out_specs=pl.BlockSpec((tm, Np), lambda i: (i, 0)),
        compiler_params=pltpu.CompilerParams(
            dimension_semantics=("parallel",),
            vmem_limit_bytes=VMEM_LIMIT,
        ),
    )(a, w_t, shift)
    return out[:M, :N]


# --------------------------------------------------------------------------
# Pallas kernel 2: fused MLP head  q = relu(A @ W1 + b1) @ W2 + b2
#   A: (tm, K1p) bf16, W1: (K1p, H) bf16, W2: (H, Ap) bf16, b*: f32.
#   Keeps the 512-wide hidden activation entirely in VMEM/vregs.
# --------------------------------------------------------------------------
def _head_kernel(a_ref, w1_ref, b1_ref, w2_ref, b2_ref, o_ref):
    h = jnp.dot(a_ref[...], w1_ref[...], preferred_element_type=jnp.float32)
    h = jnp.maximum(h + b1_ref[...], 0.0)
    q = jnp.dot(h.astype(w2_ref.dtype), w2_ref[...],
                preferred_element_type=jnp.float32)
    o_ref[...] = (q + b2_ref[...]).astype(o_ref.dtype)


def mlp_head(a, w1_t, b1, w2_t, b2, *, out_dtype=jnp.float32, tm_max=512):
    """a: (M, K1), w1_t: (K1, H), w2_t: (H, A) -> (M, A) in out_dtype."""
    M, K1 = a.shape
    K1w, H = w1_t.shape
    Hw, A = w2_t.shape
    assert K1w == K1 and Hw == H, (K1w, K1, Hw, H)
    assert H % 128 == 0, H

    K1p = _round_up(K1, 128)
    Ap = _round_up(A, 128)

    wb = jnp.dtype(w1_t.dtype).itemsize
    out_b = jnp.dtype(out_dtype).itemsize
    per_row = K1p * jnp.dtype(a.dtype).itemsize + Ap * out_b
    resident = 2 * (K1p * H * wb + H * wb * Ap + (H + Ap) * 4)
    tm = _pick_tm(M, per_row, resident, tm_max)
    Mp = _round_up(M, tm)

    if Mp != M or K1p != K1:
        a = jnp.pad(a, ((0, Mp - M), (0, K1p - K1)))
    if K1p != K1:
        w1_t = jnp.pad(w1_t, ((0, K1p - K1), (0, 0)))
    if Ap != A:
        w2_t = jnp.pad(w2_t, ((0, 0), (0, Ap - A)))
        b2 = jnp.pad(b2, ((0, 0), (0, Ap - A)))
    b1 = b1.astype(jnp.float32)
    b2 = b2.astype(jnp.float32)

    out = pl.pallas_call(
        _head_kernel,
        out_shape=jax.ShapeDtypeStruct((Mp, Ap), out_dtype),
        grid=(pl.cdiv(Mp, tm),),
        in_specs=[
            pl.BlockSpec((tm, K1p), lambda i: (i, 0)),   # streamed over M
            pl.BlockSpec((K1p, H), lambda i: (0, 0)),    # resident W1
            pl.BlockSpec((1, H), lambda i: (0, 0)),      # resident b1
            pl.BlockSpec((H, Ap), lambda i: (0, 0)),     # resident W2
            pl.BlockSpec((1, Ap), lambda i: (0, 0)),     # resident b2
        ],
        out_specs=pl.BlockSpec((tm, Ap), lambda i: (i, 0)),
        compiler_params=pltpu.CompilerParams(
            dimension_semantics=("parallel",),
            vmem_limit_bytes=VMEM_LIMIT,
        ),
    )(a, w1_t, b1, w2_t, b2)
    return out[:M, :A]


# --------------------------------------------------------------------------
# Glue: channels-last im2col (pure JAX strided slicing) + conv wrapper
# --------------------------------------------------------------------------
def im2col_nhwc(x, kh, kw, stride):
    """x: (N, H, W, C) -> (N*Ho*Wo, kh*kw*C); kernel-pos major, channel minor."""
    N, H, W, C = x.shape
    Ho = (H - kh) // stride + 1
    Wo = (W - kw) // stride + 1
    cols = []
    for i in range(kh):
        for j in range(kw):
            cols.append(
                x[:, i:i + stride * (Ho - 1) + 1:stride,
                     j:j + stride * (Wo - 1) + 1:stride, :]
            )
    p = jnp.stack(cols, axis=3)                 # (N, Ho, Wo, kh*kw, C)
    return p.reshape(N * Ho * Wo, kh * kw * C), Ho, Wo


def conv_layer(x_nhwc, w_t, shift, kh, kw, stride):
    """Conv2d (VALID) + folded-BN shift + ReLU via the fused Pallas matmul."""
    N = x_nhwc.shape[0]
    patches, Ho, Wo = im2col_nhwc(x_nhwc, kh, kw, stride)
    oc = w_t.shape[1]
    y = fused_matmul(patches, w_t, shift, relu=True, out_dtype=COMPUTE_DTYPE)
    return y.reshape(N, Ho, Wo, oc)             # stays NHWC


# --------------------------------------------------------------------------
# DQN parameters, one-time folding, forward
# --------------------------------------------------------------------------
def conv2d_size_out(size, kernel_size, stride, padding=0):
    return (size - kernel_size - 2 * padding) // stride + 1


def init_dqn_params(key, h, w, num_actions):
    convh = conv2d_size_out(conv2d_size_out(conv2d_size_out(h, 8, 4), 2, 2), 3, 1)
    convw = conv2d_size_out(conv2d_size_out(conv2d_size_out(w, 8, 4), 2, 2), 3, 1)
    conv_out_dim = convh * convw * 64

    ks = jax.random.split(key, 16)
    n = lambda k, shape, s=0.05: (s * jax.random.normal(k, shape)).astype(jnp.float32)

    return {
        "conv1_w": n(ks[0], (32, 3, 8, 8)),
        "conv1_b": n(ks[1], (32,)),
        "bn1_gamma": 1.0 + n(ks[2], (32,), 0.1),
        "bn1_beta": n(ks[2], (32,), 0.1),
        "bn1_mean": n(ks[3], (32,), 0.1),
        "bn1_var": 1.0 + jnp.abs(n(ks[3], (32,), 0.1)),

        "conv2_w": n(ks[4], (64, 32, 2, 2)),
        "conv2_b": n(ks[5], (64,)),
        "bn2_gamma": 1.0 + n(ks[6], (64,), 0.1),
        "bn2_beta": n(ks[6], (64,), 0.1),
        "bn2_mean": n(ks[7], (64,), 0.1),
        "bn2_var": 1.0 + jnp.abs(n(ks[7], (64,), 0.1)),

        "conv3_w": n(ks[8], (64, 64, 3, 3)),
        "conv3_b": n(ks[9], (64,)),
        "bn3_gamma": 1.0 + n(ks[10], (64,), 0.1),
        "bn3_beta": n(ks[10], (64,), 0.1),
        "bn3_mean": n(ks[11], (64,), 0.1),
        "bn3_var": 1.0 + jnp.abs(n(ks[11], (64,), 0.1)),

        "l1_w": n(ks[12], (512, conv_out_dim)),
        "l1_b": n(ks[13], (512,)),
        "l2_w": n(ks[14], (num_actions, 512)),
        "l2_b": n(ks[15], (num_actions,)),
    }


def fold_params(params, h, w, eps=1e-5):
    """One-time prep: fold BN scale into conv weights (channels-last layout),
    fold conv bias + BN mean/beta into a shift, permute l1 columns so the NHWC
    flatten matches torch's NCHW .view(N, -1), and cast weights to bf16."""
    def conv_fold(cw, cb, gamma, beta, mean, var):
        oc = cw.shape[0]
        inv_std = gamma / jnp.sqrt(var + eps)
        # (OC, C, kh, kw) -> (OC, kh, kw, C) to match channels-minor im2col.
        w_flat = jnp.transpose(cw, (0, 2, 3, 1)).reshape(oc, -1)
        w_t = (w_flat * inv_std[:, None]).T.astype(COMPUTE_DTYPE)     # (K, OC)
        shift = ((cb - mean) * inv_std + beta)[None, :].astype(jnp.float32)
        return w_t, shift

    prep = {}
    prep["c1_wt"], prep["c1_shift"] = conv_fold(
        params["conv1_w"], params["conv1_b"], params["bn1_gamma"],
        params["bn1_beta"], params["bn1_mean"], params["bn1_var"])
    prep["c2_wt"], prep["c2_shift"] = conv_fold(
        params["conv2_w"], params["conv2_b"], params["bn2_gamma"],
        params["bn2_beta"], params["bn2_mean"], params["bn2_var"])
    prep["c3_wt"], prep["c3_shift"] = conv_fold(
        params["conv3_w"], params["conv3_b"], params["bn3_gamma"],
        params["bn3_beta"], params["bn3_mean"], params["bn3_var"])

    # Linear-1: permute columns from NCHW-flatten to NHWC-flatten order.
    h3 = conv2d_size_out(conv2d_size_out(conv2d_size_out(h, 8, 4), 2, 2), 3, 1)
    w3 = conv2d_size_out(conv2d_size_out(conv2d_size_out(w, 8, 4), 2, 2), 3, 1)
    c3 = params["conv3_w"].shape[0]
    hidden = params["l1_w"].shape[0]
    l1_nhwc = params["l1_w"].reshape(hidden, c3, h3, w3) \
                            .transpose(0, 2, 3, 1).reshape(hidden, -1)
    prep["l1_wt"] = l1_nhwc.T.astype(COMPUTE_DTYPE)                   # (K, 512)
    prep["l1_b"] = params["l1_b"][None, :].astype(jnp.float32)
    prep["l2_wt"] = params["l2_w"].T.astype(COMPUTE_DTYPE)            # (512, A)
    prep["l2_b"] = params["l2_b"][None, :].astype(jnp.float32)
    return prep


def dqn_forward(prep, x):
    """x: (N, 3, H, W) f32 (torch layout).  Returns (N, num_actions) f32."""
    x = jnp.transpose(x, (0, 2, 3, 1)).astype(COMPUTE_DTYPE)   # NCHW -> NHWC once
    out = conv_layer(x, prep["c1_wt"], prep["c1_shift"], 8, 8, 4)
    out = conv_layer(out, prep["c2_wt"], prep["c2_shift"], 2, 2, 2)
    out = conv_layer(out, prep["c3_wt"], prep["c3_shift"], 3, 3, 1)
    n = out.shape[0]
    flat = out.reshape(n, -1)                                   # NHWC flatten
    # Fused flatten -> linear1 -> ReLU -> linear2 in one Pallas call.
    q = mlp_head(flat, prep["l1_wt"], prep["l1_b"],
                 prep["l2_wt"], prep["l2_b"], out_dtype=jnp.float32)
    return q


# --------------------------------------------------------------------------
# Pure-JAX f32 reference (for correctness check)
# --------------------------------------------------------------------------
def reference_forward(params, x, eps=1e-5):
    def conv(x, w, b, s):
        y = jax.lax.conv_general_dilated(
            x, w, (s, s), "VALID",
            dimension_numbers=("NCHW", "OIHW", "NCHW"))
        return y + b[None, :, None, None]

    def bn(y, g, bt, m, v):
        return ((y - m[None, :, None, None])
                / jnp.sqrt(v[None, :, None, None] + eps)
                * g[None, :, None, None] + bt[None, :, None, None])

    out = jax.nn.relu(bn(conv(x, params["conv1_w"], params["conv1_b"], 4),
                         params["bn1_gamma"], params["bn1_beta"],
                         params["bn1_mean"], params["bn1_var"]))
    out = jax.nn.relu(bn(conv(out, params["conv2_w"], params["conv2_b"], 2),
                         params["bn2_gamma"], params["bn2_beta"],
                         params["bn2_mean"], params["bn2_var"]))
    out = jax.nn.relu(bn(conv(out, params["conv3_w"], params["conv3_b"], 1),
                         params["bn3_gamma"], params["bn3_beta"],
                         params["bn3_mean"], params["bn3_var"]))
    flat = out.reshape(out.shape[0], -1)
    h1 = jax.nn.relu(flat @ params["l1_w"].T + params["l1_b"])
    return h1 @ params["l2_w"].T + params["l2_b"]


# --------------------------------------------------------------------------
if __name__ == "__main__":
    # Small but valid DQN geometry: 36x36 -> 8x8 -> 4x4 -> 2x2, conv_out = 256.
    batch, h, w, num_actions = 2, 36, 36, 4

    key = jax.random.PRNGKey(0)
    k_params, k_x = jax.random.split(key)
    params = init_dqn_params(k_params, h, w, num_actions)
    x = jax.random.normal(k_x, (batch, 3, h, w), dtype=jnp.float32)

    prep = fold_params(params, h, w)            # one-time BN fold / permute / bf16
    q = jax.jit(dqn_forward)(prep, x)
    jax.block_until_ready(q)

    q_ref = reference_forward(params, x)
    assert q.shape == (batch, num_actions), q.shape
    # bf16 MXU operands with f32 accumulation -> relaxed tolerance vs f32 ref.
    assert jnp.allclose(q, q_ref, atol=5e-2, rtol=5e-2), "mismatch vs reference"

    print("KERNEL_OK")
</pallas_src>

<mosaic_0001>
module attributes {stable_mosaic.version = 11 : i64} {
  func.func @_fused_matmul_kernel(%arg0: i32, %arg1: memref<128x256xbf16, #tpu.memory_space<vmem>>, %arg2: memref<256x128xbf16, #tpu.memory_space<vmem>>, %arg3: memref<1x128xf32, #tpu.memory_space<vmem>>, %arg4: memref<128x128xbf16, #tpu.memory_space<vmem>>) attributes {dimension_semantics = [#tpu.dimension_semantics<parallel>], iteration_bounds = array<i64: 1>, scalar_prefetch = 0 : i64, scratch_operands = 0 : i64, tpu.core_type = #tpu.core_type<tc>, window_params = [{transform_indices = @transform_0, window_bounds = array<i64: 128, 256>}, {pipeline_mode = #tpu.pipeline_mode<synchronous>, transform_indices = @transform_1, window_bounds = array<i64: 256, 128>}, {pipeline_mode = #tpu.pipeline_mode<synchronous>, transform_indices = @transform_2, window_bounds = array<i64: 1, 128>}, {transform_indices = @transform_3, window_bounds = array<i64: 128, 128>}]} {
    %c0 = arith.constant 0 : index
    %c0_0 = arith.constant 0 : index
    %0 = vector.load %arg1[%c0, %c0_0] : memref<128x256xbf16, #tpu.memory_space<vmem>>, vector<128x256xbf16>
    %c0_1 = arith.constant 0 : index
    %c0_2 = arith.constant 0 : index
    %1 = vector.load %arg2[%c0_1, %c0_2] : memref<256x128xbf16, #tpu.memory_space<vmem>>, vector<256x128xbf16>
    %cst = arith.constant dense<0.000000e+00> : vector<128x128xf32>
    %2 = tpu.matmul %0, %1, %cst {dimension_numbers = #tpu.dot_dimension_numbers<[1], [0], [0], [1], [0, 0, 1, 1], [], []>} : vector<128x256xbf16>, vector<256x128xbf16>, vector<128x128xf32> -> vector<128x128xf32>
    %c0_3 = arith.constant 0 : index
    %c0_4 = arith.constant 0 : index
    %3 = vector.load %arg3[%c0_3, %c0_4] : memref<1x128xf32, #tpu.memory_space<vmem>>, vector<1x128xf32>
    %4 = vector.broadcast %3 : vector<1x128xf32> to vector<128x128xf32>
    %5 = arith.addf %2, %4 : vector<128x128xf32>
    %cst_5 = arith.constant 0.000000e+00 : f32
    %6 = vector.broadcast %cst_5 : f32 to vector<128x128xf32>
    %7 = arith.maximumf %5, %6 : vector<128x128xf32>
    %8 = arith.truncf %7 : vector<128x128xf32> to vector<128x128xbf16>
    %c0_6 = arith.constant 0 : index
    %c0_7 = arith.constant 0 : index
    %9 = vector.load %arg4[%c0_6, %c0_7] : memref<128x128xbf16, #tpu.memory_space<vmem>>, vector<128x128xbf16>
    tpu.vector_store %arg4[%c0_6, %c0_7], %8 {strides = array<i32>} : memref<128x128xbf16, #tpu.memory_space<vmem>>, vector<128x128xbf16>,
    return
  }
  func.func @transform_0(%arg0: i32) -> (i32, i32) {
    %c0_i32 = arith.constant 0 : i32
    %c0_i32_0 = arith.constant 0 : i32
    return %arg0, %c0_i32 : i32, i32
  }
  func.func @transform_1(%arg0: i32) -> (i32, i32) {
    %c0_i32 = arith.constant 0 : i32
    %c0_i32_0 = arith.constant 0 : i32
    %c0_i32_1 = arith.constant 0 : i32
    return %c0_i32, %c0_i32_0 : i32, i32
  }
  func.func @transform_2(%arg0: i32) -> (i32, i32) {
    %c0_i32 = arith.constant 0 : i32
    %c0_i32_0 = arith.constant 0 : i32
    %c0_i32_1 = arith.constant 0 : i32
    return %c0_i32, %c0_i32_0 : i32, i32
  }
  func.func @transform_3(%arg0: i32) -> (i32, i32) {
    %c0_i32 = arith.constant 0 : i32
    %c0_i32_0 = arith.constant 0 : i32
    return %arg0, %c0_i32 : i32, i32
  }
}

module attributes {stable_mosaic.version = 11 : i64} {
  func.func @_fused_matmul_kernel(%arg0: i32, %arg1: memref<32x128xbf16, #tpu.memory_space<vmem>>, %arg2: memref<128x128xbf16, #tpu.memory_space<vmem>>, %arg3: memref<1x128xf32, #tpu.memory_space<vmem>>, %arg4: memref<32x128xbf16, #tpu.memory_space<vmem>>) attributes {dimension_semantics = [#tpu.dimension_semantics<parallel>], iteration_bounds = array<i64: 1>, scalar_prefetch = 0 : i64, scratch_operands = 0 : i64, tpu.core_type = #tpu.core_type<tc>, window_params = [{transform_indices = @transform_0, window_bounds = array<i64: 32, 128>}, {pipeline_mode = #tpu.pipeline_mode<synchronous>, transform_indices = @transform_1, window_bounds = array<i64: 128, 128>}, {pipeline_mode = #tpu.pipeline_mode<synchronous>, transform_indices = @transform_2, window_bounds = array<i64: 1, 128>}, {transform_indices = @transform_3, window_bounds = array<i64: 32, 128>}]} {
    %c0 = arith.constant 0 : index
    %c0_0 = arith.constant 0 : index
    %0 = vector.load %arg1[%c0, %c0_0] : memref<32x128xbf16, #tpu.memory_space<vmem>>, vector<32x128xbf16>
    %c0_1 = arith.constant 0 : index
    %c0_2 = arith.constant 0 : index
    %1 = vector.load %arg2[%c0_1, %c0_2] : memref<128x128xbf16, #tpu.memory_space<vmem>>, vector<128x128xbf16>
    %cst = arith.constant dense<0.000000e+00> : vector<32x128xf32>
    %2 = tpu.matmul %0, %1, %cst {dimension_numbers = #tpu.dot_dimension_numbers<[1], [0], [0], [1], [0, 0, 1, 1], [], []>} : vector<32x128xbf16>, vector<128x128xbf16>, vector<32x128xf32> -> vector<32x128xf32>
    %c0_3 = arith.constant 0 : index
    %c0_4 = arith.constant 0 : index
    %3 = vector.load %arg3[%c0_3, %c0_4] : memref<1x128xf32, #tpu.memory_space<vmem>>, vector<1x128xf32>
    %4 = vector.broadcast %3 : vector<1x128xf32> to vector<32x128xf32>
    %5 = arith.addf %2, %4 : vector<32x128xf32>
    %cst_5 = arith.constant 0.000000e+00 : f32
    %6 = vector.broadcast %cst_5 : f32 to vector<32x128xf32>
    %7 = arith.maximumf %5, %6 : vector<32x128xf32>
    %8 = arith.truncf %7 : vector<32x128xf32> to vector<32x128xbf16>
    %c0_6 = arith.constant 0 : index
    %c0_7 = arith.constant 0 : index
    %9 = vector.load %arg4[%c0_6, %c0_7] : memref<32x128xbf16, #tpu.memory_space<vmem>>, vector<32x128xbf16>
    tpu.vector_store %arg4[%c0_6, %c0_7], %8 {strides = array<i32>} : memref<32x128xbf16, #tpu.memory_space<vmem>>, vector<32x128xbf16>,
    return
  }
  func.func @transform_0(%arg0: i32) -> (i32, i32) {
    %c0_i32 = arith.constant 0 : i32
    %c0_i32_0 = arith.constant 0 : i32
    return %arg0, %c0_i32 : i32, i32
  }
  func.func @transform_1(%arg0: i32) -> (i32, i32) {
    %c0_i32 = arith.constant 0 : i32
    %c0_i32_0 = arith.constant 0 : i32
    %c0_i32_1 = arith.constant 0 : i32
    return %c0_i32, %c0_i32_0 : i32, i32
  }
  func.func @transform_2(%arg0: i32) -> (i32, i32) {
    %c0_i32 = arith.constant 0 : i32
    %c0_i32_0 = arith.constant 0 : i32
    %c0_i32_1 = arith.constant 0 : i32
    return %c0_i32, %c0_i32_0 : i32, i32
  }
  func.func @transform_3(%arg0: i32) -> (i32, i32) {
    %c0_i32 = arith.constant 0 : i32
    %c0_i32_0 = arith.constant 0 : i32
    return %arg0, %c0_i32 : i32, i32
  }
}

module attributes {stable_mosaic.version = 11 : i64} {
  func.func @_fused_matmul_kernel(%arg0: i32, %arg1: memref<16x640xbf16, #tpu.memory_space<vmem>>, %arg2: memref<640x128xbf16, #tpu.memory_space<vmem>>, %arg3: memref<1x128xf32, #tpu.memory_space<vmem>>, %arg4: memref<16x128xbf16, #tpu.memory_space<vmem>>) attributes {dimension_semantics = [#tpu.dimension_semantics<parallel>], iteration_bounds = array<i64: 1>, scalar_prefetch = 0 : i64, scratch_operands = 0 : i64, tpu.core_type = #tpu.core_type<tc>, window_params = [{transform_indices = @transform_0, window_bounds = array<i64: 16, 640>}, {pipeline_mode = #tpu.pipeline_mode<synchronous>, transform_indices = @transform_1, window_bounds = array<i64: 640, 128>}, {pipeline_mode = #tpu.pipeline_mode<synchronous>, transform_indices = @transform_2, window_bounds = array<i64: 1, 128>}, {transform_indices = @transform_3, window_bounds = array<i64: 16, 128>}]} {
    %c0 = arith.constant 0 : index
    %c0_0 = arith.constant 0 : index
    %0 = vector.load %arg1[%c0, %c0_0] : memref<16x640xbf16, #tpu.memory_space<vmem>>, vector<16x640xbf16>
    %c0_1 = arith.constant 0 : index
    %c0_2 = arith.constant 0 : index
    %1 = vector.load %arg2[%c0_1, %c0_2] : memref<640x128xbf16, #tpu.memory_space<vmem>>, vector<640x128xbf16>
    %cst = arith.constant dense<0.000000e+00> : vector<16x128xf32>
    %2 = tpu.matmul %0, %1, %cst {dimension_numbers = #tpu.dot_dimension_numbers<[1], [0], [0], [1], [0, 0, 1, 1], [], []>} : vector<16x640xbf16>, vector<640x128xbf16>, vector<16x128xf32> -> vector<16x128xf32>
    %c0_3 = arith.constant 0 : index
    %c0_4 = arith.constant 0 : index
    %3 = vector.load %arg3[%c0_3, %c0_4] : memref<1x128xf32, #tpu.memory_space<vmem>>, vector<1x128xf32>
    %4 = vector.broadcast %3 : vector<1x128xf32> to vector<16x128xf32>
    %5 = arith.addf %2, %4 : vector<16x128xf32>
    %cst_5 = arith.constant 0.000000e+00 : f32
    %6 = vector.broadcast %cst_5 : f32 to vector<16x128xf32>
    %7 = arith.maximumf %5, %6 : vector<16x128xf32>
    %8 = arith.truncf %7 : vector<16x128xf32> to vector<16x128xbf16>
    %c0_6 = arith.constant 0 : index
    %c0_7 = arith.constant 0 : index
    %9 = vector.load %arg4[%c0_6, %c0_7] : memref<16x128xbf16, #tpu.memory_space<vmem>>, vector<16x128xbf16>
    tpu.vector_store %arg4[%c0_6, %c0_7], %8 {strides = array<i32>} : memref<16x128xbf16, #tpu.memory_space<vmem>>, vector<16x128xbf16>,
    return
  }
  func.func @transform_0(%arg0: i32) -> (i32, i32) {
    %c0_i32 = arith.constant 0 : i32
    %c0_i32_0 = arith.constant 0 : i32
    return %arg0, %c0_i32 : i32, i32
  }
  func.func @transform_1(%arg0: i32) -> (i32, i32) {
    %c0_i32 = arith.constant 0 : i32
    %c0_i32_0 = arith.constant 0 : i32
    %c0_i32_1 = arith.constant 0 : i32
    return %c0_i32, %c0_i32_0 : i32, i32
  }
  func.func @transform_2(%arg0: i32) -> (i32, i32) {
    %c0_i32 = arith.constant 0 : i32
    %c0_i32_0 = arith.constant 0 : i32
    %c0_i32_1 = arith.constant 0 : i32
    return %c0_i32, %c0_i32_0 : i32, i32
  }
  func.func @transform_3(%arg0: i32) -> (i32, i32) {
    %c0_i32 = arith.constant 0 : i32
    %c0_i32_0 = arith.constant 0 : i32
    return %arg0, %c0_i32 : i32, i32
  }
}

module attributes {stable_mosaic.version = 11 : i64} {
  func.func @_head_kernel(%arg0: i32, %arg1: memref<16x256xbf16, #tpu.memory_space<vmem>>, %arg2: memref<256x512xbf16, #tpu.memory_space<vmem>>, %arg3: memref<1x512xf32, #tpu.memory_space<vmem>>, %arg4: memref<512x128xbf16, #tpu.memory_space<vmem>>, %arg5: memref<1x128xf32, #tpu.memory_space<vmem>>, %arg6: memref<16x128xf32, #tpu.memory_space<vmem>>) attributes {dimension_semantics = [#tpu.dimension_semantics<parallel>], iteration_bounds = array<i64: 1>, scalar_prefetch = 0 : i64, scratch_operands = 0 : i64, tpu.core_type = #tpu.core_type<tc>, window_params = [{transform_indices = @transform_0, window_bounds = array<i64: 16, 256>}, {pipeline_mode = #tpu.pipeline_mode<synchronous>, transform_indices = @transform_1, window_bounds = array<i64: 256, 512>}, {pipeline_mode = #tpu.pipeline_mode<synchronous>, transform_indices = @transform_2, window_bounds = array<i64: 1, 512>}, {pipeline_mode = #tpu.pipeline_mode<synchronous>, transform_indices = @transform_3, window_bounds = array<i64: 512, 128>}, {pipeline_mode = #tpu.pipeline_mode<synchronous>, transform_indices = @transform_4, window_bounds = array<i64: 1, 128>}, {transform_indices = @transform_5, window_bounds = array<i64: 16, 128>}]} {
    %c0 = arith.constant 0 : index
    %c0_0 = arith.constant 0 : index
    %0 = vector.load %arg1[%c0, %c0_0] : memref<16x256xbf16, #tpu.memory_space<vmem>>, vector<16x256xbf16>
    %c0_1 = arith.constant 0 : index
    %c0_2 = arith.constant 0 : index
    %1 = vector.load %arg2[%c0_1, %c0_2] : memref<256x512xbf16, #tpu.memory_space<vmem>>, vector<256x512xbf16>
    %cst = arith.constant dense<0.000000e+00> : vector<16x512xf32>
    %2 = tpu.matmul %0, %1, %cst {dimension_numbers = #tpu.dot_dimension_numbers<[1], [0], [0], [1], [0, 0, 1, 1], [], []>} : vector<16x256xbf16>, vector<256x512xbf16>, vector<16x512xf32> -> vector<16x512xf32>
    %c0_3 = arith.constant 0 : index
    %c0_4 = arith.constant 0 : index
    %3 = vector.load %arg3[%c0_3, %c0_4] : memref<1x512xf32, #tpu.memory_space<vmem>>, vector<1x512xf32>
    %4 = vector.broadcast %3 : vector<1x512xf32> to vector<16x512xf32>
    %5 = arith.addf %2, %4 : vector<16x512xf32>
    %cst_5 = arith.constant 0.000000e+00 : f32
    %6 = vector.broadcast %cst_5 : f32 to vector<16x512xf32>
    %7 = arith.maximumf %5, %6 : vector<16x512xf32>
    %8 = arith.truncf %7 : vector<16x512xf32> to vector<16x512xbf16>
    %c0_6 = arith.constant 0 : index
    %c0_7 = arith.constant 0 : index
    %9 = vector.load %arg4[%c0_6, %c0_7] : memref<512x128xbf16, #tpu.memory_space<vmem>>, vector<512x128xbf16>
    %cst_8 = arith.constant dense<0.000000e+00> : vector<16x128xf32>
    %10 = tpu.matmul %8, %9, %cst_8 {dimension_numbers = #tpu.dot_dimension_numbers<[1], [0], [0], [1], [0, 0, 1, 1], [], []>} : vector<16x512xbf16>, vector<512x128xbf16>, vector<16x128xf32> -> vector<16x128xf32>
    %c0_9 = arith.constant 0 : index
    %c0_10 = arith.constant 0 : index
    %11 = vector.load %arg5[%c0_9, %c0_10] : memref<1x128xf32, #tpu.memory_space<vmem>>, vector<1x128xf32>
    %12 = vector.broadcast %11 : vector<1x128xf32> to vector<16x128xf32>
    %13 = arith.addf %10, %12 : vector<16x128xf32>
    %c0_11 = arith.constant 0 : index
    %c0_12 = arith.constant 0 : index
    %14 = vector.load %arg6[%c0_11, %c0_12] : memref<16x128xf32, #tpu.memory_space<vmem>>, vector<16x128xf32>
    tpu.vector_store %arg6[%c0_11, %c0_12], %13 {strides = array<i32>} : memref<16x128xf32, #tpu.memory_space<vmem>>, vector<16x128xf32>,
    return
  }
  func.func @transform_0(%arg0: i32) -> (i32, i32) {
    %c0_i32 = arith.constant 0 : i32
    %c0_i32_0 = arith.constant 0 : i32
    return %arg0, %c0_i32 : i32, i32
  }
  func.func @transform_1(%arg0: i32) -> (i32, i32) {
    %c0_i32 = arith.constant 0 : i32
    %c0_i32_0 = arith.constant 0 : i32
    %c0_i32_1 = arith.constant 0 : i32
    return %c0_i32, %c0_i32_0 : i32, i32
  }
  func.func @transform_2(%arg0: i32) -> (i32, i32) {
    %c0_i32 = arith.constant 0 : i32
    %c0_i32_0 = arith.constant 0 : i32
    %c0_i32_1 = arith.constant 0 : i32
    return %c0_i32, %c0_i32_0 : i32, i32
  }
  func.func @transform_3(%arg0: i32) -> (i32, i32) {
    %c0_i32 = arith.constant 0 : i32
    %c0_i32_0 = arith.constant 0 : i32
    %c0_i32_1 = arith.constant 0 : i32
    return %c0_i32, %c0_i32_0 : i32, i32
  }
  func.func @transform_4(%arg0: i32) -> (i32, i32) {
    %c0_i32 = arith.constant 0 : i32
    %c0_i32_0 = arith.constant 0 : i32
    %c0_i32_1 = arith.constant 0 : i32
    return %c0_i32, %c0_i32_0 : i32, i32
  }
  func.func @transform_5(%arg0: i32) -> (i32, i32) {
    %c0_i32 = arith.constant 0 : i32
    %c0_i32_0 = arith.constant 0 : i32
    return %arg0, %c0_i32 : i32, i32
  }
}

</mosaic_0001>

<llo_original>
// kernel: dqn_forward.4
$region0: #{dqn_forward.4}
  #allocation0 [shape = 'u32[]', space=smem, size = 0x4, offset = 0x4, fixed_abs, tag = 'smem constant byte address 0x4 - core index']
  #allocation1 [shape = 'u32[72,128]{1,0:T(1,128)}', space=vmem, size = 0x9000, scoped, tag = 'internal scratch']
  %s0 = inlined_call_operand.vmem [shape: bf16[128,256], index: 0, kind: input, shape index: {}]
  %s1 = inlined_call_operand.vmem [shape: bf16[256,128], index: 1, kind: input, shape index: {}]
  %s2 = inlined_call_operand.vmem [shape: f32[1,128], index: 2, kind: input, shape index: {}]
  %s3 = inlined_call_operand.vmem [shape: bf16[128,128], index: 3, kind: output, shape index: {}]
  %s4 = sld [smem:[#allocation0]]
  $region22: #{dqn_forward.4} parent=0
    _
  %s6 = ssub.s32 1, %s4
  %s7 = scalar_select 0, %s6, %s4
  // Predicated region
  $region2: #{dqn_forward.4} parent=0 // pred_check
    _
  $region3: #{dqn_forward.4} parent=0 // pred_check_branch
    %9 = sbr.rel (0) target = $region5
  $region4: #{dqn_forward.4} parent=0 // pred_region
    _
  $region5: #{dqn_forward.4} parent=0 // pred_fallthru
    _
  // Predicated region
  $region6: #{dqn_forward.4} parent=0 // pred_check
    _
  $region7: #{dqn_forward.4} parent=0 // pred_check_branch
    %11 = sbr.rel (0) target = $region9
  $region8: #{dqn_forward.4} parent=0 // pred_region
    _
  $region9: #{dqn_forward.4} parent=0 // pred_fallthru
    _
  // Predicated region
  $region10: #{dqn_forward.4} parent=0 // pred_check
    _
  $region11: #{dqn_forward.4} parent=0 // pred_check_branch
    %13 = sbr.rel (0) target = $region13
  $region12: #{dqn_forward.4} parent=0 // pred_region
    _
  $region13: #{dqn_forward.4} parent=0 // pred_fallthru
    _
  %v14 = vld [vmem:[%s0] sm:$0xff]
  %v15 = vld [vmem:[%s0 + $0x8] sm:$0xff]
  %v16 = vld [vmem:[%s0 + $0x10] sm:$0xff]
  %v17 = vld [vmem:[%s0 + $0x18] sm:$0xff]
  %v18 = vld [vmem:[%s0 + $0x20] sm:$0xff]
  %v19 = vld [vmem:[%s0 + $0x28] sm:$0xff]
  %v20 = vld [vmem:[%s0 + $0x30] sm:$0xff]
  %v21 = vld [vmem:[%s0 + $0x38] sm:$0xff]
  %v22 = vld [vmem:[%s0 + $0x40] sm:$0xff]
  %v23 = vld [vmem:[%s0 + $0x48] sm:$0xff]
  %v24 = vld [vmem:[%s0 + $0x50] sm:$0xff]
  %v25 = vld [vmem:[%s0 + $0x58] sm:$0xff]
  %v26 = vld [vmem:[%s0 + $0x60] sm:$0xff]
  %v27 = vld [vmem:[%s0 + $0x68] sm:$0xff]
  %v28 = vld [vmem:[%s0 + $0x70] sm:$0xff]
  %v29 = vld [vmem:[%s0 + $0x78] sm:$0xff]
  %v30 = vld [vmem:[%s1] sm:$0xf]
  %v31 = vld [vmem:[%s1 + $0x4] sm:$0xf]
  %v32 = vld [vmem:[%s1 + $0x8] sm:$0xf]
  %v33 = vld [vmem:[%s1 + $0xc] sm:$0xf]
  %v34 = vld [vmem:[%s1 + $0x10] sm:$0xf]
  %v35 = vld [vmem:[%s1 + $0x14] sm:$0xf]
  %v36 = vld [vmem:[%s1 + $0x18] sm:$0xf]
  %v37 = vld [vmem:[%s1 + $0x1c] sm:$0xf]
  %v38 = vld [vmem:[%s1 + $0x20] sm:$0xf]
  %v39 = vld [vmem:[%s1 + $0x24] sm:$0xf]
  %v40 = vld [vmem:[%s1 + $0x28] sm:$0xf]
  %v41 = vld [vmem:[%s1 + $0x2c] sm:$0xf]
  %v42 = vld [vmem:[%s1 + $0x30] sm:$0xf]
  %v43 = vld [vmem:[%s1 + $0x34] sm:$0xf]
  %v44 = vld [vmem:[%s1 + $0x38] sm:$0xf]
  %v45 = vld [vmem:[%s1 + $0x3c] sm:$0xf]
  %v46 = vld [vmem:[%s1 + $0x40] sm:$0xf]
  %v47 = vld [vmem:[%s1 + $0x44] sm:$0xf]
  %v48 = vld [vmem:[%s1 + $0x48] sm:$0xf]
  %v49 = vld [vmem:[%s1 + $0x4c] sm:$0xf]
  %v50 = vld [vmem:[%s1 + $0x50] sm:$0xf]
  %v51 = vld [vmem:[%s1 + $0x54] sm:$0xf]
  %v52 = vld [vmem:[%s1 + $0x58] sm:$0xf]
  %v53 = vld [vmem:[%s1 + $0x5c] sm:$0xf]
  %v54 = vld [vmem:[%s1 + $0x60] sm:$0xf]
  %v55 = vld [vmem:[%s1 + $0x64] sm:$0xf]
  %v56 = vld [vmem:[%s1 + $0x68] sm:$0xf]
  %v57 = vld [vmem:[%s1 + $0x6c] sm:$0xf]
  %v58 = vld [vmem:[%s1 + $0x70] sm:$0xf]
  %v59 = vld [vmem:[%s1 + $0x74] sm:$0xf]
  %v60 = vld [vmem:[%s1 + $0x78] sm:$0xf]
  %v61 = vld [vmem:[%s1 + $0x7c] sm:$0xf]
  %v62 = vld [vmem:[%s2] sm:$0x1]
  %v64 = vperm.slane %v62, 0
  %v82 = vunpack.c.l.b16 %v14
  %v83 = vunpack.c.h.b16 %v14
  %v84 = vunpack.c.l.b16 %v15
  %v85 = vunpack.c.h.b16 %v15
  %v86 = vunpack.c.l.b16 %v16
  %v87 = vunpack.c.h.b16 %v16
  %v88 = vunpack.c.l.b16 %v17
  %v89 = vunpack.c.h.b16 %v17
  %v90 = vunpack.c.l.b16 %v18
  %v91 = vunpack.c.h.b16 %v18
  %v92 = vunpack.c.l.b16 %v19
  %v93 = vunpack.c.h.b16 %v19
  %v94 = vunpack.c.l.b16 %v20
  %v95 = vunpack.c.h.b16 %v20
  %v96 = vunpack.c.l.b16 %v21
  %v97 = vunpack.c.h.b16 %v21
  %v98 = vunpack.c.l.b16 %v22
  %v99 = vunpack.c.h.b16 %v22
  %v100 = vunpack.c.l.b16 %v23
  %v101 = vunpack.c.h.b16 %v23
  %v102 = vunpack.c.l.b16 %v24
  %v103 = vunpack.c.h.b16 %v24
  %v104 = vunpack.c.l.b16 %v25
  %v105 = vunpack.c.h.b16 %v25
  %v106 = vunpack.c.l.b16 %v26
  %v107 = vunpack.c.h.b16 %v26
  %v108 = vunpack.c.l.b16 %v27
  %v109 = vunpack.c.h.b16 %v27
  %v110 = vunpack.c.l.b16 %v28
  %v111 = vunpack.c.h.b16 %v28
  %v112 = vunpack.c.l.b16 %v29
  %v113 = vunpack.c.h.b16 %v29
  %v114 = vpack.c.b16 %v84, %v82
  %v115 = vpack.c.b16 %v85, %v83
  %v116 = vpack.c.b16 %v88, %v86
  %v117 = vpack.c.b16 %v89, %v87
  %v118 = vpack.c.b16 %v92, %v90
  %v119 = vpack.c.b16 %v93, %v91
  %v120 = vpack.c.b16 %v96, %v94
  %v121 = vpack.c.b16 %v97, %v95
  %v122 = vpack.c.b16 %v100, %v98
  %v123 = vpack.c.b16 %v101, %v99
  %v124 = vpack.c.b16 %v104, %v102
  %v125 = vpack.c.b16 %v105, %v103
  %v126 = vpack.c.b16 %v108, %v106
  %v127 = vpack.c.b16 %v109, %v107
  %v128 = vpack.c.b16 %v112, %v110
  %v129 = vpack.c.b16 %v113, %v111
  %v178 = vunpack.c.l.b16 %v30
  %v179 = vunpack.c.l.b16 %v31
  %v180 = vunpack.c.l.b16 %v32
  %v181 = vunpack.c.l.b16 %v33
  %v182 = vunpack.c.l.b16 %v34
  %v183 = vunpack.c.l.b16 %v35
  %v184 = vunpack.c.l.b16 %v36
  %v185 = vunpack.c.l.b16 %v37
  %v186 = vunpack.c.l.b16 %v38
  %v187 = vunpack.c.l.b16 %v39
  %v188 = vunpack.c.l.b16 %v40
  %v189 = vunpack.c.l.b16 %v41
  %v190 = vunpack.c.l.b16 %v42
  %v191 = vunpack.c.l.b16 %v43
  %v192 = vunpack.c.l.b16 %v44
  %v193 = vunpack.c.l.b16 %v45
  %v194 = vunpack.c.l.b16 %v46
  %v195 = vunpack.c.l.b16 %v47
  %v196 = vunpack.c.l.b16 %v48
  %v197 = vunpack.c.l.b16 %v49
  %v198 = vunpack.c.l.b16 %v50
  %v199 = vunpack.c.l.b16 %v51
  %v200 = vunpack.c.l.b16 %v52
  %v201 = vunpack.c.l.b16 %v53
  %v202 = vunpack.c.l.b16 %v54
  %v203 = vunpack.c.l.b16 %v55
  %v204 = vunpack.c.l.b16 %v56
  %v205 = vunpack.c.l.b16 %v57
  %v206 = vunpack.c.l.b16 %v58
  %v207 = vunpack.c.l.b16 %v59
  %v208 = vunpack.c.l.b16 %v60
  %v209 = vunpack.c.l.b16 %v61
  %v210 = vpack.c.b16 %v179, %v178
  %v211 = vpack.c.b16 %v181, %v180
  %v212 = vpack.c.b16 %v183, %v182
  %v213 = vpack.c.b16 %v185, %v184
  %v214 = vpack.c.b16 %v187, %v186
  %v215 = vpack.c.b16 %v189, %v188
  %v216 = vpack.c.b16 %v191, %v190
  %v217 = vpack.c.b16 %v193, %v192
  %v218 = vpack.c.b16 %v195, %v194
  %v219 = vpack.c.b16 %v197, %v196
  %v220 = vpack.c.b16 %v199, %v198
  %v221 = vpack.c.b16 %v201, %v200
  %v222 = vpack.c.b16 %v203, %v202
  %v223 = vpack.c.b16 %v205, %v204
  %v224 = vpack.c.b16 %v207, %v206
  %v225 = vpack.c.b16 %v209, %v208
  %242 = vmatpush.bf16.msra.mxu0 %v217
  %243 = vmatpush.bf16.msra.mxu0 %v216
  %244 = vmatpush.bf16.msra.mxu0 %v215
  %245 = vmatpush.bf16.msra.mxu0 %v214
  %246 = vmatpush.bf16.msra.mxu0 %v213
  %247 = vmatpush.bf16.msra.mxu0 %v212
  %248 = vmatpush.bf16.msra.mxu0 %v211
  %249 = vmatpush.bf16.msra.mxu0 %v210
  %250 = vmatmul.bf16.gmra.mxu0 %v114
  %v251 = vpop.f32.mrf.mxu0
  %v252 = vadd.f32 %v64, %v251
  %v253 = vpop.f32.mrf.mxu0
  %v254 = vadd.f32 %v64, %v253
  %255 = vmatmul.bf16.gmra.mxu0 %v116
  %v256 = vpop.f32.mrf.mxu0
  %v257 = vadd.f32 %v64, %v256
  %v258 = vpop.f32.mrf.mxu0
  %v259 = vadd.f32 %v64, %v258
  %260 = vmatmul.bf16.gmra.mxu0 %v118
  %v261 = vpop.f32.mrf.mxu0
  %v262 = vadd.f32 %v64, %v261
  %v263 = vpop.f32.mrf.mxu0
  %v264 = vadd.f32 %v64, %v263
  %265 = vmatmul.bf16.gmra.mxu0 %v120
  %v266 = vpop.f32.mrf.mxu0
  %v267 = vadd.f32 %v64, %v266
  %v268 = vpop.f32.mrf.mxu0
  %v269 = vadd.f32 %v64, %v268
  %270 = vmatmul.bf16.gmra.mxu0 %v122
  %v271 = vpop.f32.mrf.mxu0
  %v272 = vadd.f32 %v64, %v271
  %v273 = vpop.f32.mrf.mxu0
  %v274 = vadd.f32 %v64, %v273
  %275 = vmatmul.bf16.gmra.mxu0 %v124
  %v276 = vpop.f32.mrf.mxu0
  %v277 = vadd.f32 %v64, %v276
  %v278 = vpop.f32.mrf.mxu0
  %v279 = vadd.f32 %v64, %v278
  %280 = vmatmul.bf16.gmra.mxu0 %v126
  %v281 = vpop.f32.mrf.mxu0
  %v282 = vadd.f32 %v64, %v281
  %v283 = vpop.f32.mrf.mxu0
  %v284 = vadd.f32 %v64, %v283
  %285 = vmatmul.bf16.gmra.mxu0 %v128
  %v286 = vpop.f32.mrf.mxu0
  %v287 = vadd.f32 %v64, %v286
  %v288 = vpop.f32.mrf.mxu0
  %v289 = vadd.f32 %v64, %v288
  %290 = vdwg.mxu0
  %291 = vmatpush.bf16.msra.mxu0 %v225
  %292 = vmatpush.bf16.msra.mxu0 %v224
  %293 = vmatpush.bf16.msra.mxu0 %v223
  %294 = vmatpush.bf16.msra.mxu0 %v222
  %295 = vmatpush.bf16.msra.mxu0 %v221
  %296 = vmatpush.bf16.msra.mxu0 %v220
  %297 = vmatpush.bf16.msra.mxu0 %v219
  %298 = vmatpush.bf16.msra.mxu0 %v218
  %299 = vmatmul.bf16.gmra.mxu0 %v115
  %v300 = vpop.f32.mrf.mxu0
  %v301 = vadd.f32 %v252, %v300
  %v302 = vpop.f32.mrf.mxu0
  %v303 = vadd.f32 %v254, %v302
  %304 = vmatmul.bf16.gmra.mxu0 %v117
  %v305 = vpop.f32.mrf.mxu0
  %v306 = vadd.f32 %v257, %v305
  %v307 = vpop.f32.mrf.mxu0
  %v308 = vadd.f32 %v259, %v307
  %309 = vmatmul.bf16.gmra.mxu0 %v119
  %v310 = vpop.f32.mrf.mxu0
  %v311 = vadd.f32 %v262, %v310
  %v312 = vpop.f32.mrf.mxu0
  %v313 = vadd.f32 %v264, %v312
  %314 = vmatmul.bf16.gmra.mxu0 %v121
  %v315 = vpop.f32.mrf.mxu0
  %v316 = vadd.f32 %v267, %v315
  %v317 = vpop.f32.mrf.mxu0
  %v318 = vadd.f32 %v269, %v317
  %319 = vmatmul.bf16.gmra.mxu0 %v123
  %v320 = vpop.f32.mrf.mxu0
  %v321 = vadd.f32 %v272, %v320
  %v322 = vpop.f32.mrf.mxu0
  %v323 = vadd.f32 %v274, %v322
  %324 = vmatmul.bf16.gmra.mxu0 %v125
  %v325 = vpop.f32.mrf.mxu0
  %v326 = vadd.f32 %v277, %v325
  %v327 = vpop.f32.mrf.mxu0
  %v328 = vadd.f32 %v279, %v327
  %329 = vmatmul.bf16.gmra.mxu0 %v127
  %v330 = vpop.f32.mrf.mxu0
  %v331 = vadd.f32 %v282, %v330
  %v332 = vpop.f32.mrf.mxu0
  %v333 = vadd.f32 %v284, %v332
  %334 = vmatmul.bf16.gmra.mxu0 %v129
  %v335 = vpop.f32.mrf.mxu0
  %v336 = vadd.f32 %v287, %v335
  %v337 = vpop.f32.mrf.mxu0
  %v338 = vadd.f32 %v289, %v337
  %339 = vdwg.mxu0
  %v340 = vmax.f32 %v301, 0.0
  %v341 = vmax.f32 %v303, 0.0
  %v342 = vmax.f32 %v306, 0.0
  %v343 = vmax.f32 %v308, 0.0
  %v344 = vmax.f32 %v311, 0.0
  %v345 = vmax.f32 %v313, 0.0
  %v346 = vmax.f32 %v316, 0.0
  %v347 = vmax.f32 %v318, 0.0
  %v348 = vmax.f32 %v321, 0.0
  %v349 = vmax.f32 %v323, 0.0
  %v350 = vmax.f32 %v326, 0.0
  %v351 = vmax.f32 %v328, 0.0
  %v352 = vmax.f32 %v331, 0.0
  %v353 = vmax.f32 %v333, 0.0
  %v354 = vmax.f32 %v336, 0.0
  %v355 = vmax.f32 %v338, 0.0
  %v356 = vpack.c.bf16 %v340, %v340
  %v357 = vpack.c.bf16 %v341, %v341
  %v358 = vpack.c.bf16 %v342, %v342
  %v359 = vpack.c.bf16 %v343, %v343
  %v360 = vpack.c.bf16 %v344, %v344
  %v361 = vpack.c.bf16 %v345, %v345
  %v362 = vpack.c.bf16 %v346, %v346
  %v363 = vpack.c.bf16 %v347, %v347
  %v364 = vpack.c.bf16 %v348, %v348
  %v365 = vpack.c.bf16 %v349, %v349
  %v366 = vpack.c.bf16 %v350, %v350
  %v367 = vpack.c.bf16 %v351, %v351
  %v368 = vpack.c.bf16 %v352, %v352
  %v369 = vpack.c.bf16 %v353, %v353
  %v370 = vpack.c.bf16 %v354, %v354
  %v371 = vpack.c.bf16 %v355, %v355
  %372 = vst [vmem:[%s3] sm:$0xf] %v356
  %373 = vst [vmem:[%s3 + $0x4] sm:$0xf] %v357
  %374 = vst [vmem:[%s3 + $0x8] sm:$0xf] %v358
  %375 = vst [vmem:[%s3 + $0xc] sm:$0xf] %v359
  %376 = vst [vmem:[%s3 + $0x10] sm:$0xf] %v360
  %377 = vst [vmem:[%s3 + $0x14] sm:$0xf] %v361
  %378 = vst [vmem:[%s3 + $0x18] sm:$0xf] %v362
  %379 = vst [vmem:[%s3 + $0x1c] sm:$0xf] %v363
  %380 = vst [vmem:[%s3 + $0x20] sm:$0xf] %v364
  %381 = vst [vmem:[%s3 + $0x24] sm:$0xf] %v365
  %382 = vst [vmem:[%s3 + $0x28] sm:$0xf] %v366
  %383 = vst [vmem:[%s3 + $0x2c] sm:$0xf] %v367
  %384 = vst [vmem:[%s3 + $0x30] sm:$0xf] %v368
  %385 = vst [vmem:[%s3 + $0x34] sm:$0xf] %v369
  %386 = vst [vmem:[%s3 + $0x38] sm:$0xf] %v370
  %387 = vst [vmem:[%s3 + $0x3c] sm:$0xf] %v371
  // Predicated region
  $region14: #{dqn_forward.4} parent=0 // pred_check
    _
  $region15: #{dqn_forward.4} parent=0 // pred_check_branch
    %389 = sbr.rel (0) target = $region17
  $region16: #{dqn_forward.4} parent=0 // pred_region
    _
  $region17: #{dqn_forward.4} parent=0 // pred_fallthru
    _
  // Predicated region
  $region18: #{dqn_forward.4} parent=0 // pred_check
    _
  $region19: #{dqn_forward.4} parent=0 // pred_check_branch
    %391 = sbr.rel (0) target = $region21
  $region20: #{dqn_forward.4} parent=0 // pred_region
    _
  $region21: #{dqn_forward.4} parent=0 // pred_fallthru
    _

// kernel: dqn_forward.5
$region0: #{dqn_forward.5}
  #allocation0 [shape = 'u32[]', space=smem, size = 0x4, offset = 0x4, fixed_abs, tag = 'smem constant byte address 0x4 - core index']
  #allocation1 [shape = 'u32[72,128]{1,0:T(1,128)}', space=vmem, size = 0x9000, scoped, tag = 'internal scratch']
  %s0 = inlined_call_operand.vmem [shape: bf16[32,128], index: 0, kind: input, shape index: {}]
  %s1 = inlined_call_operand.vmem [shape: bf16[128,128], index: 1, kind: input, shape index: {}]
  %s2 = inlined_call_operand.vmem [shape: f32[1,128], index: 2, kind: input, shape index: {}]
  %s3 = inlined_call_operand.vmem [shape: bf16[32,128], index: 3, kind: output, shape index: {}]
  %s4 = sld [smem:[#allocation0]]
  $region22: #{dqn_forward.5} parent=0
    _
  %s6 = ssub.s32 1, %s4
  %s7 = scalar_select 0, %s6, %s4
  // Predicated region
  $region2: #{dqn_forward.5} parent=0 // pred_check
    _
  $region3: #{dqn_forward.5} parent=0 // pred_check_branch
    %9 = sbr.rel (0) target = $region5
  $region4: #{dqn_forward.5} parent=0 // pred_region
    _
  $region5: #{dqn_forward.5} parent=0 // pred_fallthru
    _
  // Predicated region
  $region6: #{dqn_forward.5} parent=0 // pred_check
    _
  $region7: #{dqn_forward.5} parent=0 // pred_check_branch
    %11 = sbr.rel (0) target = $region9
  $region8: #{dqn_forward.5} parent=0 // pred_region
    _
  $region9: #{dqn_forward.5} parent=0 // pred_fallthru
    _
  // Predicated region
  $region10: #{dqn_forward.5} parent=0 // pred_check
    _
  $region11: #{dqn_forward.5} parent=0 // pred_check_branch
    %13 = sbr.rel (0) target = $region13
  $region12: #{dqn_forward.5} parent=0 // pred_region
    _
  $region13: #{dqn_forward.5} parent=0 // pred_fallthru
    _
  %v14 = vld [vmem:[%s0] sm:$0xf]
  %v15 = vld [vmem:[%s0 + $0x4] sm:$0xf]
  %v16 = vld [vmem:[%s0 + $0x8] sm:$0xf]
  %v17 = vld [vmem:[%s0 + $0xc] sm:$0xf]
  %v18 = vld [vmem:[%s1] sm:$0xf]
  %v19 = vld [vmem:[%s1 + $0x4] sm:$0xf]
  %v20 = vld [vmem:[%s1 + $0x8] sm:$0xf]
  %v21 = vld [vmem:[%s1 + $0xc] sm:$0xf]
  %v22 = vld [vmem:[%s1 + $0x10] sm:$0xf]
  %v23 = vld [vmem:[%s1 + $0x14] sm:$0xf]
  %v24 = vld [vmem:[%s1 + $0x18] sm:$0xf]
  %v25 = vld [vmem:[%s1 + $0x1c] sm:$0xf]
  %v26 = vld [vmem:[%s1 + $0x20] sm:$0xf]
  %v27 = vld [vmem:[%s1 + $0x24] sm:$0xf]
  %v28 = vld [vmem:[%s1 + $0x28] sm:$0xf]
  %v29 = vld [vmem:[%s1 + $0x2c] sm:$0xf]
  %v30 = vld [vmem:[%s1 + $0x30] sm:$0xf]
  %v31 = vld [vmem:[%s1 + $0x34] sm:$0xf]
  %v32 = vld [vmem:[%s1 + $0x38] sm:$0xf]
  %v33 = vld [vmem:[%s1 + $0x3c] sm:$0xf]
  %v34 = vld [vmem:[%s2] sm:$0x1]
  %v36 = vperm.slane %v34, 0
  %v42 = vunpack.c.l.b16 %v14
  %v43 = vunpack.c.l.b16 %v15
  %v44 = vunpack.c.l.b16 %v16
  %v45 = vunpack.c.l.b16 %v17
  %v46 = vpack.c.b16 %v43, %v42
  %v47 = vpack.c.b16 %v45, %v44
  %v66 = vunpack.c.l.b16 %v18
  %v67 = vunpack.c.l.b16 %v19
  %v68 = vunpack.c.l.b16 %v20
  %v69 = vunpack.c.l.b16 %v21
  %v70 = vunpack.c.l.b16 %v22
  %v71 = vunpack.c.l.b16 %v23
  %v72 = vunpack.c.l.b16 %v24
  %v73 = vunpack.c.l.b16 %v25
  %v74 = vunpack.c.l.b16 %v26
  %v75 = vunpack.c.l.b16 %v27
  %v76 = vunpack.c.l.b16 %v28
  %v77 = vunpack.c.l.b16 %v29
  %v78 = vunpack.c.l.b16 %v30
  %v79 = vunpack.c.l.b16 %v31
  %v80 = vunpack.c.l.b16 %v32
  %v81 = vunpack.c.l.b16 %v33
  %v82 = vpack.c.b16 %v67, %v66
  %v83 = vpack.c.b16 %v69, %v68
  %v84 = vpack.c.b16 %v71, %v70
  %v85 = vpack.c.b16 %v73, %v72
  %v86 = vpack.c.b16 %v75, %v74
  %v87 = vpack.c.b16 %v77, %v76
  %v88 = vpack.c.b16 %v79, %v78
  %v89 = vpack.c.b16 %v81, %v80
  %98 = vmatpush.bf16.msra.mxu0 %v89
  %99 = vmatpush.bf16.msra.mxu0 %v88
  %100 = vmatpush.bf16.msra.mxu0 %v87
  %101 = vmatpush.bf16.msra.mxu0 %v86
  %102 = vmatpush.bf16.msra.mxu0 %v85
  %103 = vmatpush.bf16.msra.mxu0 %v84
  %104 = vmatpush.bf16.msra.mxu0 %v83
  %105 = vmatpush.bf16.msra.mxu0 %v82
  %106 = vmatmul.bf16.gmra.mxu0 %v46
  %v107 = vpop.f32.mrf.mxu0
  %v108 = vadd.f32 %v36, %v107
  %v109 = vpop.f32.mrf.mxu0
  %v110 = vadd.f32 %v36, %v109
  %111 = vmatmul.bf16.gmra.mxu0 %v47
  %v112 = vpop.f32.mrf.mxu0
  %v113 = vadd.f32 %v36, %v112
  %v114 = vpop.f32.mrf.mxu0
  %v115 = vadd.f32 %v36, %v114
  %116 = vdwg.mxu0
  %v117 = vmax.f32 %v108, 0.0
  %v118 = vmax.f32 %v110, 0.0
  %v119 = vmax.f32 %v113, 0.0
  %v120 = vmax.f32 %v115, 0.0
  %v121 = vpack.c.bf16 %v117, %v117
  %v122 = vpack.c.bf16 %v118, %v118
  %v123 = vpack.c.bf16 %v119, %v119
  %v124 = vpack.c.bf16 %v120, %v120
  %125 = vst [vmem:[%s3] sm:$0xf] %v121
  %126 = vst [vmem:[%s3 + $0x4] sm:$0xf] %v122
  %127 = vst [vmem:[%s3 + $0x8] sm:$0xf] %v123
  %128 = vst [vmem:[%s3 + $0xc] sm:$0xf] %v124
  // Predicated region
  $region14: #{dqn_forward.5} parent=0 // pred_check
    _
  $region15: #{dqn_forward.5} parent=0 // pred_check_branch
    %130 = sbr.rel (0) target = $region17
  $region16: #{dqn_forward.5} parent=0 // pred_region
    _
  $region17: #{dqn_forward.5} parent=0 // pred_fallthru
    _
  // Predicated region
  $region18: #{dqn_forward.5} parent=0 // pred_check
    _
  $region19: #{dqn_forward.5} parent=0 // pred_check_branch
    %132 = sbr.rel (0) target = $region21
  $region20: #{dqn_forward.5} parent=0 // pred_region
    _
  $region21: #{dqn_forward.5} parent=0 // pred_fallthru
    _

// kernel: dqn_forward.6
$region0: #{dqn_forward.6}
  #allocation0 [shape = 'u32[]', space=smem, size = 0x4, offset = 0x4, fixed_abs, tag = 'smem constant byte address 0x4 - core index']
  #allocation1 [shape = 'u32[72,128]{1,0:T(1,128)}', space=vmem, size = 0x9000, scoped, tag = 'internal scratch']
  %s0 = inlined_call_operand.vmem [shape: bf16[16,640], index: 0, kind: input, shape index: {}]
  %s1 = inlined_call_operand.vmem [shape: bf16[640,128], index: 1, kind: input, shape index: {}]
  %s2 = inlined_call_operand.vmem [shape: f32[1,128], index: 2, kind: input, shape index: {}]
  %s3 = inlined_call_operand.vmem [shape: bf16[16,128], index: 3, kind: output, shape index: {}]
  %s4 = sld [smem:[#allocation0]]
  $region22: #{dqn_forward.6} parent=0
    _
  %s6 = ssub.s32 1, %s4
  %s7 = scalar_select 0, %s6, %s4
  // Predicated region
  $region2: #{dqn_forward.6} parent=0 // pred_check
    _
  $region3: #{dqn_forward.6} parent=0 // pred_check_branch
    %9 = sbr.rel (0) target = $region5
  $region4: #{dqn_forward.6} parent=0 // pred_region
    _
  $region5: #{dqn_forward.6} parent=0 // pred_fallthru
    _
  // Predicated region
  $region6: #{dqn_forward.6} parent=0 // pred_check
    _
  $region7: #{dqn_forward.6} parent=0 // pred_check_branch
    %11 = sbr.rel (0) target = $region9
  $region8: #{dqn_forward.6} parent=0 // pred_region
    _
  $region9: #{dqn_forward.6} parent=0 // pred_fallthru
    _
  // Predicated region
  $region10: #{dqn_forward.6} parent=0 // pred_check
    _
  $region11: #{dqn_forward.6} parent=0 // pred_check_branch
    %13 = sbr.rel (0) target = $region13
  $region12: #{dqn_forward.6} parent=0 // pred_region
    _
  $region13: #{dqn_forward.6} parent=0 // pred_fallthru
    _
  %v14 = vld [vmem:[%s0] sm:$0xff]
  %v15 = vld [vmem:[%s0 + $0x8] sm:$0xff]
  %v16 = vld [vmem:[%s0 + $0x10] sm:$0xf]
  %v17 = vld [vmem:[%s0 + $0x14] sm:$0xff]
  %v18 = vld [vmem:[%s0 + $0x1c] sm:$0xff]
  %v19 = vld [vmem:[%s0 + $0x24] sm:$0xf]
  %v20 = vld [vmem:[%s1] sm:$0xf]
  %v21 = vld [vmem:[%s1 + $0x4] sm:$0xf]
  %v22 = vld [vmem:[%s1 + $0x8] sm:$0xf]
  %v23 = vld [vmem:[%s1 + $0xc] sm:$0xf]
  %v24 = vld [vmem:[%s1 + $0x10] sm:$0xf]
  %v25 = vld [vmem:[%s1 + $0x14] sm:$0xf]
  %v26 = vld [vmem:[%s1 + $0x18] sm:$0xf]
  %v27 = vld [vmem:[%s1 + $0x1c] sm:$0xf]
  %v28 = vld [vmem:[%s1 + $0x20] sm:$0xf]
  %v29 = vld [vmem:[%s1 + $0x24] sm:$0xf]
  %v30 = vld [vmem:[%s1 + $0x28] sm:$0xf]
  %v31 = vld [vmem:[%s1 + $0x2c] sm:$0xf]
  %v32 = vld [vmem:[%s1 + $0x30] sm:$0xf]
  %v33 = vld [vmem:[%s1 + $0x34] sm:$0xf]
  %v34 = vld [vmem:[%s1 + $0x38] sm:$0xf]
  %v35 = vld [vmem:[%s1 + $0x3c] sm:$0xf]
  %v36 = vld [vmem:[%s1 + $0x40] sm:$0xf]
  %v37 = vld [vmem:[%s1 + $0x44] sm:$0xf]
  %v38 = vld [vmem:[%s1 + $0x48] sm:$0xf]
  %v39 = vld [vmem:[%s1 + $0x4c] sm:$0xf]
  %v40 = vld [vmem:[%s1 + $0x50] sm:$0xf]
  %v41 = vld [vmem:[%s1 + $0x54] sm:$0xf]
  %v42 = vld [vmem:[%s1 + $0x58] sm:$0xf]
  %v43 = vld [vmem:[%s1 + $0x5c] sm:$0xf]
  %v44 = vld [vmem:[%s1 + $0x60] sm:$0xf]
  %v45 = vld [vmem:[%s1 + $0x64] sm:$0xf]
  %v46 = vld [vmem:[%s1 + $0x68] sm:$0xf]
  %v47 = vld [vmem:[%s1 + $0x6c] sm:$0xf]
  %v48 = vld [vmem:[%s1 + $0x70] sm:$0xf]
  %v49 = vld [vmem:[%s1 + $0x74] sm:$0xf]
  %v50 = vld [vmem:[%s1 + $0x78] sm:$0xf]
  %v51 = vld [vmem:[%s1 + $0x7c] sm:$0xf]
  %v52 = vld [vmem:[%s1 + $0x80] sm:$0xf]
  %v53 = vld [vmem:[%s1 + $0x84] sm:$0xf]
  %v54 = vld [vmem:[%s1 + $0x88] sm:$0xf]
  %v55 = vld [vmem:[%s1 + $0x8c] sm:$0xf]
  %v56 = vld [vmem:[%s1 + $0x90] sm:$0xf]
  %v57 = vld [vmem:[%s1 + $0x94] sm:$0xf]
  %v58 = vld [vmem:[%s1 + $0x98] sm:$0xf]
  %v59 = vld [vmem:[%s1 + $0x9c] sm:$0xf]
  %v60 = vld [vmem:[%s1 + $0xa0] sm:$0xf]
  %v61 = vld [vmem:[%s1 + $0xa4] sm:$0xf]
  %v62 = vld [vmem:[%s1 + $0xa8] sm:$0xf]
  %v63 = vld [vmem:[%s1 + $0xac] sm:$0xf]
  %v64 = vld [vmem:[%s1 + $0xb0] sm:$0xf]
  %v65 = vld [vmem:[%s1 + $0xb4] sm:$0xf]
  %v66 = vld [vmem:[%s1 + $0xb8] sm:$0xf]
  %v67 = vld [vmem:[%s1 + $0xbc] sm:$0xf]
  %v68 = vld [vmem:[%s1 + $0xc0] sm:$0xf]
  %v69 = vld [vmem:[%s1 + $0xc4] sm:$0xf]
  %v70 = vld [vmem:[%s1 + $0xc8] sm:$0xf]
  %v71 = vld [vmem:[%s1 + $0xcc] sm:$0xf]
  %v72 = vld [vmem:[%s1 + $0xd0] sm:$0xf]
  %v73 = vld [vmem:[%s1 + $0xd4] sm:$0xf]
  %v74 = vld [vmem:[%s1 + $0xd8] sm:$0xf]
  %v75 = vld [vmem:[%s1 + $0xdc] sm:$0xf]
  %v76 = vld [vmem:[%s1 + $0xe0] sm:$0xf]
  %v77 = vld [vmem:[%s1 + $0xe4] sm:$0xf]
  %v78 = vld [vmem:[%s1 + $0xe8] sm:$0xf]
  %v79 = vld [vmem:[%s1 + $0xec] sm:$0xf]
  %v80 = vld [vmem:[%s1 + $0xf0] sm:$0xf]
  %v81 = vld [vmem:[%s1 + $0xf4] sm:$0xf]
  %v82 = vld [vmem:[%s1 + $0xf8] sm:$0xf]
  %v83 = vld [vmem:[%s1 + $0xfc] sm:$0xf]
  %v84 = vld [vmem:[%s1 + $0x100] sm:$0xf]
  %v85 = vld [vmem:[%s1 + $0x104] sm:$0xf]
  %v86 = vld [vmem:[%s1 + $0x108] sm:$0xf]
  %v87 = vld [vmem:[%s1 + $0x10c] sm:$0xf]
  %v88 = vld [vmem:[%s1 + $0x110] sm:$0xf]
  %v89 = vld [vmem:[%s1 + $0x114] sm:$0xf]
  %v90 = vld [vmem:[%s1 + $0x118] sm:$0xf]
  %v91 = vld [vmem:[%s1 + $0x11c] sm:$0xf]
  %v92 = vld [vmem:[%s1 + $0x120] sm:$0xf]
  %v93 = vld [vmem:[%s1 + $0x124] sm:$0xf]
  %v94 = vld [vmem:[%s1 + $0x128] sm:$0xf]
  %v95 = vld [vmem:[%s1 + $0x12c] sm:$0xf]
  %v96 = vld [vmem:[%s1 + $0x130] sm:$0xf]
  %v97 = vld [vmem:[%s1 + $0x134] sm:$0xf]
  %v98 = vld [vmem:[%s1 + $0x138] sm:$0xf]
  %v99 = vld [vmem:[%s1 + $0x13c] sm:$0xf]
  %v100 = vld [vmem:[%s2] sm:$0x1]
  %v102 = vperm.slane %v100, 0
  %v110 = vunpack.c.l.b16 %v14
  %v111 = vunpack.c.h.b16 %v14
  %v112 = vunpack.c.l.b16 %v15
  %v113 = vunpack.c.h.b16 %v15
  %v114 = vunpack.c.l.b16 %v16
  %v115 = vunpack.c.l.b16 %v17
  %v116 = vunpack.c.h.b16 %v17
  %v117 = vunpack.c.l.b16 %v18
  %v118 = vunpack.c.h.b16 %v18
  %v119 = vunpack.c.l.b16 %v19
  %v120 = vpack.c.b16 %v115, %v110
  %v121 = vpack.c.b16 %v116, %v111
  %v122 = vpack.c.b16 %v117, %v112
  %v123 = vpack.c.b16 %v118, %v113
  %v124 = vpack.c.b16 %v119, %v114
  %v210 = vunpack.c.l.b16 %v20
  %v211 = vunpack.c.l.b16 %v21
  %v212 = vunpack.c.l.b16 %v22
  %v213 = vunpack.c.l.b16 %v23
  %v214 = vunpack.c.l.b16 %v24
  %v215 = vunpack.c.l.b16 %v25
  %v216 = vunpack.c.l.b16 %v26
  %v217 = vunpack.c.l.b16 %v27
  %v218 = vunpack.c.l.b16 %v28
  %v219 = vunpack.c.l.b16 %v29
  %v220 = vunpack.c.l.b16 %v30
  %v221 = vunpack.c.l.b16 %v31
  %v222 = vunpack.c.l.b16 %v32
  %v223 = vunpack.c.l.b16 %v33
  %v224 = vunpack.c.l.b16 %v34
  %v225 = vunpack.c.l.b16 %v35
  %v226 = vunpack.c.l.b16 %v36
  %v227 = vunpack.c.l.b16 %v37
  %v228 = vunpack.c.l.b16 %v38
  %v229 = vunpack.c.l.b16 %v39
  %v230 = vunpack.c.l.b16 %v40
  %v231 = vunpack.c.l.b16 %v41
  %v232 = vunpack.c.l.b16 %v42
  %v233 = vunpack.c.l.b16 %v43
  %v234 = vunpack.c.l.b16 %v44
  %v235 = vunpack.c.l.b16 %v45
  %v236 = vunpack.c.l.b16 %v46
  %v237 = vunpack.c.l.b16 %v47
  %v238 = vunpack.c.l.b16 %v48
  %v239 = vunpack.c.l.b16 %v49
  %v240 = vunpack.c.l.b16 %v50
  %v241 = vunpack.c.l.b16 %v51
  %v242 = vunpack.c.l.b16 %v52
  %v243 = vunpack.c.l.b16 %v53
  %v244 = vunpack.c.l.b16 %v54
  %v245 = vunpack.c.l.b16 %v55
  %v246 = vunpack.c.l.b16 %v56
  %v247 = vunpack.c.l.b16 %v57
  %v248 = vunpack.c.l.b16 %v58
  %v249 = vunpack.c.l.b16 %v59
  %v250 = vunpack.c.l.b16 %v60
  %v251 = vunpack.c.l.b16 %v61
  %v252 = vunpack.c.l.b16 %v62
  %v253 = vunpack.c.l.b16 %v63
  %v254 = vunpack.c.l.b16 %v64
  %v255 = vunpack.c.l.b16 %v65
  %v256 = vunpack.c.l.b16 %v66
  %v257 = vunpack.c.l.b16 %v67
  %v258 = vunpack.c.l.b16 %v68
  %v259 = vunpack.c.l.b16 %v69
  %v260 = vunpack.c.l.b16 %v70
  %v261 = vunpack.c.l.b16 %v71
  %v262 = vunpack.c.l.b16 %v72
  %v263 = vunpack.c.l.b16 %v73
  %v264 = vunpack.c.l.b16 %v74
  %v265 = vunpack.c.l.b16 %v75
  %v266 = vunpack.c.l.b16 %v76
  %v267 = vunpack.c.l.b16 %v77
  %v268 = vunpack.c.l.b16 %v78
  %v269 = vunpack.c.l.b16 %v79
  %v270 = vunpack.c.l.b16 %v80
  %v271 = vunpack.c.l.b16 %v81
  %v272 = vunpack.c.l.b16 %v82
  %v273 = vunpack.c.l.b16 %v83
  %v274 = vunpack.c.l.b16 %v84
  %v275 = vunpack.c.l.b16 %v85
  %v276 = vunpack.c.l.b16 %v86
  %v277 = vunpack.c.l.b16 %v87
  %v278 = vunpack.c.l.b16 %v88
  %v279 = vunpack.c.l.b16 %v89
  %v280 = vunpack.c.l.b16 %v90
  %v281 = vunpack.c.l.b16 %v91
  %v282 = vunpack.c.l.b16 %v92
  %v283 = vunpack.c.l.b16 %v93
  %v284 = vunpack.c.l.b16 %v94
  %v285 = vunpack.c.l.b16 %v95
  %v286 = vunpack.c.l.b16 %v96
  %v287 = vunpack.c.l.b16 %v97
  %v288 = vunpack.c.l.b16 %v98
  %v289 = vunpack.c.l.b16 %v99
  %v290 = vpack.c.b16 %v211, %v210
  %v291 = vpack.c.b16 %v213, %v212
  %v292 = vpack.c.b16 %v215, %v214
  %v293 = vpack.c.b16 %v217, %v216
  %v294 = vpack.c.b16 %v219, %v218
  %v295 = vpack.c.b16 %v221, %v220
  %v296 = vpack.c.b16 %v223, %v222
  %v297 = vpack.c.b16 %v225, %v224
  %v298 = vpack.c.b16 %v227, %v226
  %v299 = vpack.c.b16 %v229, %v228
  %v300 = vpack.c.b16 %v231, %v230
  %v301 = vpack.c.b16 %v233, %v232
  %v302 = vpack.c.b16 %v235, %v234
  %v303 = vpack.c.b16 %v237, %v236
  %v304 = vpack.c.b16 %v239, %v238
  %v305 = vpack.c.b16 %v241, %v240
  %v306 = vpack.c.b16 %v243, %v242
  %v307 = vpack.c.b16 %v245, %v244
  %v308 = vpack.c.b16 %v247, %v246
  %v309 = vpack.c.b16 %v249, %v248
  %v310 = vpack.c.b16 %v251, %v250
  %v311 = vpack.c.b16 %v253, %v252
  %v312 = vpack.c.b16 %v255, %v254
  %v313 = vpack.c.b16 %v257, %v256
  %v314 = vpack.c.b16 %v259, %v258
  %v315 = vpack.c.b16 %v261, %v260
  %v316 = vpack.c.b16 %v263, %v262
  %v317 = vpack.c.b16 %v265, %v264
  %v318 = vpack.c.b16 %v267, %v266
  %v319 = vpack.c.b16 %v269, %v268
  %v320 = vpack.c.b16 %v271, %v270
  %v321 = vpack.c.b16 %v273, %v272
  %v322 = vpack.c.b16 %v275, %v274
  %v323 = vpack.c.b16 %v277, %v276
  %v324 = vpack.c.b16 %v279, %v278
  %v325 = vpack.c.b16 %v281, %v280
  %v326 = vpack.c.b16 %v283, %v282
  %v327 = vpack.c.b16 %v285, %v284
  %v328 = vpack.c.b16 %v287, %v286
  %v329 = vpack.c.b16 %v289, %v288
  %370 = vmatpush.bf16.msra.mxu0 %v297
  %371 = vmatpush.bf16.msra.mxu0 %v296
  %372 = vmatpush.bf16.msra.mxu0 %v295
  %373 = vmatpush.bf16.msra.mxu0 %v294
  %374 = vmatpush.bf16.msra.mxu0 %v293
  %375 = vmatpush.bf16.msra.mxu0 %v292
  %376 = vmatpush.bf16.msra.mxu0 %v291
  %377 = vmatpush.bf16.msra.mxu0 %v290
  %378 = vmatmul.bf16.gmra.mxu0 %v120
  %v379 = vpop.f32.mrf.mxu0
  %v380 = vadd.f32 %v102, %v379
  %v381 = vpop.f32.mrf.mxu0
  %v382 = vadd.f32 %v102, %v381
  %383 = vdwg.mxu0
  %384 = vmatpush.bf16.msra.mxu0 %v305
  %385 = vmatpush.bf16.msra.mxu0 %v304
  %386 = vmatpush.bf16.msra.mxu0 %v303
  %387 = vmatpush.bf16.msra.mxu0 %v302
  %388 = vmatpush.bf16.msra.mxu0 %v301
  %389 = vmatpush.bf16.msra.mxu0 %v300
  %390 = vmatpush.bf16.msra.mxu0 %v299
  %391 = vmatpush.bf16.msra.mxu0 %v298
  %392 = vmatmul.bf16.gmra.mxu0 %v121
  %v393 = vpop.f32.mrf.mxu0
  %v394 = vadd.f32 %v380, %v393
  %v395 = vpop.f32.mrf.mxu0
  %v396 = vadd.f32 %v382, %v395
  %397 = vdwg.mxu0
  %398 = vmatpush.bf16.msra.mxu0 %v313
  %399 = vmatpush.bf16.msra.mxu0 %v312
  %400 = vmatpush.bf16.msra.mxu0 %v311
  %401 = vmatpush.bf16.msra.mxu0 %v310
  %402 = vmatpush.bf16.msra.mxu0 %v309
  %403 = vmatpush.bf16.msra.mxu0 %v308
  %404 = vmatpush.bf16.msra.mxu0 %v307
  %405 = vmatpush.bf16.msra.mxu0 %v306
  %406 = vmatmul.bf16.gmra.mxu0 %v122
  %v407 = vpop.f32.mrf.mxu0
  %v408 = vadd.f32 %v394, %v407
  %v409 = vpop.f32.mrf.mxu0
  %v410 = vadd.f32 %v396, %v409
  %411 = vdwg.mxu0
  %412 = vmatpush.bf16.msra.mxu0 %v321
  %413 = vmatpush.bf16.msra.mxu0 %v320
  %414 = vmatpush.bf16.msra.mxu0 %v319
  %415 = vmatpush.bf16.msra.mxu0 %v318
  %416 = vmatpush.bf16.msra.mxu0 %v317
  %417 = vmatpush.bf16.msra.mxu0 %v316
  %418 = vmatpush.bf16.msra.mxu0 %v315
  %419 = vmatpush.bf16.msra.mxu0 %v314
  %420 = vmatmul.bf16.gmra.mxu0 %v123
  %v421 = vpop.f32.mrf.mxu0
  %v422 = vadd.f32 %v408, %v421
  %v423 = vpop.f32.mrf.mxu0
  %v424 = vadd.f32 %v410, %v423
  %425 = vdwg.mxu0
  %426 = vmatpush.bf16.msra.mxu0 %v329
  %427 = vmatpush.bf16.msra.mxu0 %v328
  %428 = vmatpush.bf16.msra.mxu0 %v327
  %429 = vmatpush.bf16.msra.mxu0 %v326
  %430 = vmatpush.bf16.msra.mxu0 %v325
  %431 = vmatpush.bf16.msra.mxu0 %v324
  %432 = vmatpush.bf16.msra.mxu0 %v323
  %433 = vmatpush.bf16.msra.mxu0 %v322
  %434 = vmatmul.bf16.gmra.mxu0 %v124
  %v435 = vpop.f32.mrf.mxu0
  %v436 = vadd.f32 %v422, %v435
  %v437 = vpop.f32.mrf.mxu0
  %v438 = vadd.f32 %v424, %v437
  %439 = vdwg.mxu0
  %v440 = vmax.f32 %v436, 0.0
  %v441 = vmax.f32 %v438, 0.0
  %v442 = vpack.c.bf16 %v440, %v440
  %v443 = vpack.c.bf16 %v441, %v441
  %444 = vst [vmem:[%s3] sm:$0xf] %v442
  %445 = vst [vmem:[%s3 + $0x4] sm:$0xf] %v443
  // Predicated region
  $region14: #{dqn_forward.6} parent=0 // pred_check
    _
  $region15: #{dqn_forward.6} parent=0 // pred_check_branch
    %447 = sbr.rel (0) target = $region17
  $region16: #{dqn_forward.6} parent=0 // pred_region
    _
  $region17: #{dqn_forward.6} parent=0 // pred_fallthru
    _
  // Predicated region
  $region18: #{dqn_forward.6} parent=0 // pred_check
    _
  $region19: #{dqn_forward.6} parent=0 // pred_check_branch
    %449 = sbr.rel (0) target = $region21
  $region20: #{dqn_forward.6} parent=0 // pred_region
    _
  $region21: #{dqn_forward.6} parent=0 // pred_fallthru
    _

// kernel: dqn_forward.7
$region0: #{dqn_forward.7}
  #allocation0 [shape = 'u32[]', space=smem, size = 0x4, offset = 0x4, fixed_abs, tag = 'smem constant byte address 0x4 - core index']
  #allocation1 [shape = 'u32[72,128]{1,0:T(1,128)}', space=vmem, size = 0x9000, scoped, tag = 'internal scratch']
  %s0 = inlined_call_operand.vmem [shape: bf16[16,256], index: 0, kind: input, shape index: {}]
  %s1 = inlined_call_operand.vmem [shape: bf16[256,512], index: 1, kind: input, shape index: {}]
  %s2 = inlined_call_operand.vmem [shape: f32[1,512], index: 2, kind: input, shape index: {}]
  %s3 = inlined_call_operand.vmem [shape: bf16[512,128], index: 3, kind: input, shape index: {}]
  %s4 = inlined_call_operand.vmem [shape: f32[1,128], index: 4, kind: input, shape index: {}]
  %s5 = inlined_call_operand.vmem [shape: f32[16,128], index: 5, kind: output, shape index: {}]
  %s6 = sld [smem:[#allocation0]]
  $region30: #{dqn_forward.7} parent=0
    _
  %s8 = ssub.s32 1, %s6
  %s9 = scalar_select 0, %s8, %s6
  // Predicated region
  $region2: #{dqn_forward.7} parent=0 // pred_check
    _
  $region3: #{dqn_forward.7} parent=0 // pred_check_branch
    %11 = sbr.rel (0) target = $region5
  $region4: #{dqn_forward.7} parent=0 // pred_region
    _
  $region5: #{dqn_forward.7} parent=0 // pred_fallthru
    _
  // Predicated region
  $region6: #{dqn_forward.7} parent=0 // pred_check
    _
  $region7: #{dqn_forward.7} parent=0 // pred_check_branch
    %13 = sbr.rel (0) target = $region9
  $region8: #{dqn_forward.7} parent=0 // pred_region
    _
  $region9: #{dqn_forward.7} parent=0 // pred_fallthru
    _
  // Predicated region
  $region10: #{dqn_forward.7} parent=0 // pred_check
    _
  $region11: #{dqn_forward.7} parent=0 // pred_check_branch
    %15 = sbr.rel (0) target = $region13
  $region12: #{dqn_forward.7} parent=0 // pred_region
    _
  $region13: #{dqn_forward.7} parent=0 // pred_fallthru
    _
  // Predicated region
  $region14: #{dqn_forward.7} parent=0 // pred_check
    _
  $region15: #{dqn_forward.7} parent=0 // pred_check_branch
    %17 = sbr.rel (0) target = $region17
  $region16: #{dqn_forward.7} parent=0 // pred_region
    _
  $region17: #{dqn_forward.7} parent=0 // pred_fallthru
    _
  // Predicated region
  $region18: #{dqn_forward.7} parent=0 // pred_check
    _
  $region19: #{dqn_forward.7} parent=0 // pred_check_branch
    %19 = sbr.rel (0) target = $region21
  $region20: #{dqn_forward.7} parent=0 // pred_region
    _
  $region21: #{dqn_forward.7} parent=0 // pred_fallthru
    _
  %v20 = vld [vmem:[%s0] sm:$0xff]
  %v21 = vld [vmem:[%s0 + $0x8] sm:$0xff]
  %v22 = vld [vmem:[%s1] sm:$0xff]
  %v23 = vld [vmem:[%s1 + $0x8] sm:$0xff]
  %v24 = vld [vmem:[%s1 + $0x10] sm:$0xff]
  %v25 = vld [vmem:[%s1 + $0x18] sm:$0xff]
  %v26 = vld [vmem:[%s1 + $0x20] sm:$0xff]
  %v27 = vld [vmem:[%s1 + $0x28] sm:$0xff]
  %v28 = vld [vmem:[%s1 + $0x30] sm:$0xff]
  %v29 = vld [vmem:[%s1 + $0x38] sm:$0xff]
  %v30 = vld [vmem:[%s1 + $0x40] sm:$0xff]
  %v31 = vld [vmem:[%s1 + $0x48] sm:$0xff]
  %v32 = vld [vmem:[%s1 + $0x50] sm:$0xff]
  %v33 = vld [vmem:[%s1 + $0x58] sm:$0xff]
  %v34 = vld [vmem:[%s1 + $0x60] sm:$0xff]
  %v35 = vld [vmem:[%s1 + $0x68] sm:$0xff]
  %v36 = vld [vmem:[%s1 + $0x70] sm:$0xff]
  %v37 = vld [vmem:[%s1 + $0x78] sm:$0xff]
  %v38 = vld [vmem:[%s1 + $0x80] sm:$0xff]
  %v39 = vld [vmem:[%s1 + $0x88] sm:$0xff]
  %v40 = vld [vmem:[%s1 + $0x90] sm:$0xff]
  %v41 = vld [vmem:[%s1 + $0x98] sm:$0xff]
  %v42 = vld [vmem:[%s1 + $0xa0] sm:$0xff]
  %v43 = vld [vmem:[%s1 + $0xa8] sm:$0xff]
  %v44 = vld [vmem:[%s1 + $0xb0] sm:$0xff]
  %v45 = vld [vmem:[%s1 + $0xb8] sm:$0xff]
  %v46 = vld [vmem:[%s1 + $0xc0] sm:$0xff]
  %v47 = vld [vmem:[%s1 + $0xc8] sm:$0xff]
  %v48 = vld [vmem:[%s1 + $0xd0] sm:$0xff]
  %v49 = vld [vmem:[%s1 + $0xd8] sm:$0xff]
  %v50 = vld [vmem:[%s1 + $0xe0] sm:$0xff]
  %v51 = vld [vmem:[%s1 + $0xe8] sm:$0xff]
  %v52 = vld [vmem:[%s1 + $0xf0] sm:$0xff]
  %v53 = vld [vmem:[%s1 + $0xf8] sm:$0xff]
  %v54 = vld [vmem:[%s1 + $0x100] sm:$0xff]
  %v55 = vld [vmem:[%s1 + $0x108] sm:$0xff]
  %v56 = vld [vmem:[%s1 + $0x110] sm:$0xff]
  %v57 = vld [vmem:[%s1 + $0x118] sm:$0xff]
  %v58 = vld [vmem:[%s1 + $0x120] sm:$0xff]
  %v59 = vld [vmem:[%s1 + $0x128] sm:$0xff]
  %v60 = vld [vmem:[%s1 + $0x130] sm:$0xff]
  %v61 = vld [vmem:[%s1 + $0x138] sm:$0xff]
  %v62 = vld [vmem:[%s1 + $0x140] sm:$0xff]
  %v63 = vld [vmem:[%s1 + $0x148] sm:$0xff]
  %v64 = vld [vmem:[%s1 + $0x150] sm:$0xff]
  %v65 = vld [vmem:[%s1 + $0x158] sm:$0xff]
  %v66 = vld [vmem:[%s1 + $0x160] sm:$0xff]
  %v67 = vld [vmem:[%s1 + $0x168] sm:$0xff]
  %v68 = vld [vmem:[%s1 + $0x170] sm:$0xff]
  %v69 = vld [vmem:[%s1 + $0x178] sm:$0xff]
  %v70 = vld [vmem:[%s1 + $0x180] sm:$0xff]
  %v71 = vld [vmem:[%s1 + $0x188] sm:$0xff]
  %v72 = vld [vmem:[%s1 + $0x190] sm:$0xff]
  %v73 = vld [vmem:[%s1 + $0x198] sm:$0xff]
  %v74 = vld [vmem:[%s1 + $0x1a0] sm:$0xff]
  %v75 = vld [vmem:[%s1 + $0x1a8] sm:$0xff]
  %v76 = vld [vmem:[%s1 + $0x1b0] sm:$0xff]
  %v77 = vld [vmem:[%s1 + $0x1b8] sm:$0xff]
  %v78 = vld [vmem:[%s1 + $0x1c0] sm:$0xff]
  %v79 = vld [vmem:[%s1 + $0x1c8] sm:$0xff]
  %v80 = vld [vmem:[%s1 + $0x1d0] sm:$0xff]
  %v81 = vld [vmem:[%s1 + $0x1d8] sm:$0xff]
  %v82 = vld [vmem:[%s1 + $0x1e0] sm:$0xff]
  %v83 = vld [vmem:[%s1 + $0x1e8] sm:$0xff]
  %v84 = vld [vmem:[%s1 + $0x1f0] sm:$0xff]
  %v85 = vld [vmem:[%s1 + $0x1f8] sm:$0xff]
  %v86 = vld [vmem:[%s2] sm:$0xf]
  %v88 = vperm.slane %v86, 0
  %v89 = vperm.slane %v86, 1
  %v90 = vperm.slane %v86, 2
  %v91 = vperm.slane %v86, 3
  %v98 = vunpack.c.l.b16 %v20
  %v99 = vunpack.c.h.b16 %v20
  %v100 = vunpack.c.l.b16 %v21
  %v101 = vunpack.c.h.b16 %v21
  %v102 = vpack.c.b16 %v100, %v98
  %v103 = vpack.c.b16 %v101, %v99
  %v170 = vunpack.c.l.b16 %v22
  %v171 = vunpack.c.h.b16 %v22
  %v172 = vunpack.c.l.b16 %v23
  %v173 = vunpack.c.h.b16 %v23
  %v174 = vunpack.c.l.b16 %v24
  %v175 = vunpack.c.h.b16 %v24
  %v176 = vunpack.c.l.b16 %v25
  %v177 = vunpack.c.h.b16 %v25
  %v178 = vunpack.c.l.b16 %v26
  %v179 = vunpack.c.h.b16 %v26
  %v180 = vunpack.c.l.b16 %v27
  %v181 = vunpack.c.h.b16 %v27
  %v182 = vunpack.c.l.b16 %v28
  %v183 = vunpack.c.h.b16 %v28
  %v184 = vunpack.c.l.b16 %v29
  %v185 = vunpack.c.h.b16 %v29
  %v186 = vunpack.c.l.b16 %v30
  %v187 = vunpack.c.h.b16 %v30
  %v188 = vunpack.c.l.b16 %v31
  %v189 = vunpack.c.h.b16 %v31
  %v190 = vunpack.c.l.b16 %v32
  %v191 = vunpack.c.h.b16 %v32
  %v192 = vunpack.c.l.b16 %v33
  %v193 = vunpack.c.h.b16 %v33
  %v194 = vunpack.c.l.b16 %v34
  %v195 = vunpack.c.h.b16 %v34
  %v196 = vunpack.c.l.b16 %v35
  %v197 = vunpack.c.h.b16 %v35
  %v198 = vunpack.c.l.b16 %v36
  %v199 = vunpack.c.h.b16 %v36
  %v200 = vunpack.c.l.b16 %v37
  %v201 = vunpack.c.h.b16 %v37
  %v202 = vunpack.c.l.b16 %v38
  %v203 = vunpack.c.h.b16 %v38
  %v204 = vunpack.c.l.b16 %v39
  %v205 = vunpack.c.h.b16 %v39
  %v206 = vunpack.c.l.b16 %v40
  %v207 = vunpack.c.h.b16 %v40
  %v208 = vunpack.c.l.b16 %v41
  %v209 = vunpack.c.h.b16 %v41
  %v210 = vunpack.c.l.b16 %v42
  %v211 = vunpack.c.h.b16 %v42
  %v212 = vunpack.c.l.b16 %v43
  %v213 = vunpack.c.h.b16 %v43
  %v214 = vunpack.c.l.b16 %v44
  %v215 = vunpack.c.h.b16 %v44
  %v216 = vunpack.c.l.b16 %v45
  %v217 = vunpack.c.h.b16 %v45
  %v218 = vunpack.c.l.b16 %v46
  %v219 = vunpack.c.h.b16 %v46
  %v220 = vunpack.c.l.b16 %v47
  %v221 = vunpack.c.h.b16 %v47
  %v222 = vunpack.c.l.b16 %v48
  %v223 = vunpack.c.h.b16 %v48
  %v224 = vunpack.c.l.b16 %v49
  %v225 = vunpack.c.h.b16 %v49
  %v226 = vunpack.c.l.b16 %v50
  %v227 = vunpack.c.h.b16 %v50
  %v228 = vunpack.c.l.b16 %v51
  %v229 = vunpack.c.h.b16 %v51
  %v230 = vunpack.c.l.b16 %v52
  %v231 = vunpack.c.h.b16 %v52
  %v232 = vunpack.c.l.b16 %v53
  %v233 = vunpack.c.h.b16 %v53
  %v234 = vunpack.c.l.b16 %v54
  %v235 = vunpack.c.h.b16 %v54
  %v236 = vunpack.c.l.b16 %v55
  %v237 = vunpack.c.h.b16 %v55
  %v238 = vunpack.c.l.b16 %v56
  %v239 = vunpack.c.h.b16 %v56
  %v240 = vunpack.c.l.b16 %v57
  %v241 = vunpack.c.h.b16 %v57
  %v242 = vunpack.c.l.b16 %v58
  %v243 = vunpack.c.h.b16 %v58
  %v244 = vunpack.c.l.b16 %v59
  %v245 = vunpack.c.h.b16 %v59
  %v246 = vunpack.c.l.b16 %v60
  %v247 = vunpack.c.h.b16 %v60
  %v248 = vunpack.c.l.b16 %v61
  %v249 = vunpack.c.h.b16 %v61
  %v250 = vunpack.c.l.b16 %v62
  %v251 = vunpack.c.h.b16 %v62
  %v252 = vunpack.c.l.b16 %v63
  %v253 = vunpack.c.h.b16 %v63
  %v254 = vunpack.c.l.b16 %v64
  %v255 = vunpack.c.h.b16 %v64
  %v256 = vunpack.c.l.b16 %v65
  %v257 = vunpack.c.h.b16 %v65
  %v258 = vunpack.c.l.b16 %v66
  %v259 = vunpack.c.h.b16 %v66
  %v260 = vunpack.c.l.b16 %v67
  %v261 = vunpack.c.h.b16 %v67
  %v262 = vunpack.c.l.b16 %v68
  %v263 = vunpack.c.h.b16 %v68
  %v264 = vunpack.c.l.b16 %v69
  %v265 = vunpack.c.h.b16 %v69
  %v266 = vunpack.c.l.b16 %v70
  %v267 = vunpack.c.h.b16 %v70
  %v268 = vunpack.c.l.b16 %v71
  %v269 = vunpack.c.h.b16 %v71
  %v270 = vunpack.c.l.b16 %v72
  %v271 = vunpack.c.h.b16 %v72
  %v272 = vunpack.c.l.b16 %v73
  %v273 = vunpack.c.h.b16 %v73
  %v274 = vunpack.c.l.b16 %v74
  %v275 = vunpack.c.h.b16 %v74
  %v276 = vunpack.c.l.b16 %v75
  %v277 = vunpack.c.h.b16 %v75
  %v278 = vunpack.c.l.b16 %v76
  %v279 = vunpack.c.h.b16 %v76
  %v280 = vunpack.c.l.b16 %v77
  %v281 = vunpack.c.h.b16 %v77
  %v282 = vunpack.c.l.b16 %v78
  %v283 = vunpack.c.h.b16 %v78
  %v284 = vunpack.c.l.b16 %v79
  %v285 = vunpack.c.h.b16 %v79
  %v286 = vunpack.c.l.b16 %v80
  %v287 = vunpack.c.h.b16 %v80
  %v288 = vunpack.c.l.b16 %v81
  %v289 = vunpack.c.h.b16 %v81
  %v290 = vunpack.c.l.b16 %v82
  %v291 = vunpack.c.h.b16 %v82
  %v292 = vunpack.c.l.b16 %v83
  %v293 = vunpack.c.h.b16 %v83
  %v294 = vunpack.c.l.b16 %v84
  %v295 = vunpack.c.h.b16 %v84
  %v296 = vunpack.c.l.b16 %v85
  %v297 = vunpack.c.h.b16 %v85
  %v298 = vpack.c.b16 %v174, %v170
  %v299 = vpack.c.b16 %v175, %v171
  %v300 = vpack.c.b16 %v176, %v172
  %v301 = vpack.c.b16 %v177, %v173
  %v302 = vpack.c.b16 %v182, %v178
  %v303 = vpack.c.b16 %v183, %v179
  %v304 = vpack.c.b16 %v184, %v180
  %v305 = vpack.c.b16 %v185, %v181
  %v306 = vpack.c.b16 %v190, %v186
  %v307 = vpack.c.b16 %v191, %v187
  %v308 = vpack.c.b16 %v192, %v188
  %v309 = vpack.c.b16 %v193, %v189
  %v310 = vpack.c.b16 %v198, %v194
  %v311 = vpack.c.b16 %v199, %v195
  %v312 = vpack.c.b16 %v200, %v196
  %v313 = vpack.c.b16 %v201, %v197
  %v314 = vpack.c.b16 %v206, %v202
  %v315 = vpack.c.b16 %v207, %v203
  %v316 = vpack.c.b16 %v208, %v204
  %v317 = vpack.c.b16 %v209, %v205
  %v318 = vpack.c.b16 %v214, %v210
  %v319 = vpack.c.b16 %v215, %v211
  %v320 = vpack.c.b16 %v216, %v212
  %v321 = vpack.c.b16 %v217, %v213
  %v322 = vpack.c.b16 %v222, %v218
  %v323 = vpack.c.b16 %v223, %v219
  %v324 = vpack.c.b16 %v224, %v220
  %v325 = vpack.c.b16 %v225, %v221
  %v326 = vpack.c.b16 %v230, %v226
  %v327 = vpack.c.b16 %v231, %v227
  %v328 = vpack.c.b16 %v232, %v228
  %v329 = vpack.c.b16 %v233, %v229
  %v330 = vpack.c.b16 %v238, %v234
  %v331 = vpack.c.b16 %v239, %v235
  %v332 = vpack.c.b16 %v240, %v236
  %v333 = vpack.c.b16 %v241, %v237
  %v334 = vpack.c.b16 %v246, %v242
  %v335 = vpack.c.b16 %v247, %v243
  %v336 = vpack.c.b16 %v248, %v244
  %v337 = vpack.c.b16 %v249, %v245
  %v338 = vpack.c.b16 %v254, %v250
  %v339 = vpack.c.b16 %v255, %v251
  %v340 = vpack.c.b16 %v256, %v252
  %v341 = vpack.c.b16 %v257, %v253
  %v342 = vpack.c.b16 %v262, %v258
  %v343 = vpack.c.b16 %v263, %v259
  %v344 = vpack.c.b16 %v264, %v260
  %v345 = vpack.c.b16 %v265, %v261
  %v346 = vpack.c.b16 %v270, %v266
  %v347 = vpack.c.b16 %v271, %v267
  %v348 = vpack.c.b16 %v272, %v268
  %v349 = vpack.c.b16 %v273, %v269
  %v350 = vpack.c.b16 %v278, %v274
  %v351 = vpack.c.b16 %v279, %v275
  %v352 = vpack.c.b16 %v280, %v276
  %v353 = vpack.c.b16 %v281, %v277
  %v354 = vpack.c.b16 %v286, %v282
  %v355 = vpack.c.b16 %v287, %v283
  %v356 = vpack.c.b16 %v288, %v284
  %v357 = vpack.c.b16 %v289, %v285
  %v358 = vpack.c.b16 %v294, %v290
  %v359 = vpack.c.b16 %v295, %v291
  %v360 = vpack.c.b16 %v296, %v292
  %v361 = vpack.c.b16 %v297, %v293
  %426 = vmatpush.bf16.msra.mxu0 %v326
  %427 = vmatpush.bf16.msra.mxu0 %v322
  %428 = vmatpush.bf16.msra.mxu0 %v318
  %429 = vmatpush.bf16.msra.mxu0 %v314
  %430 = vmatpush.bf16.msra.mxu0 %v310
  %431 = vmatpush.bf16.msra.mxu0 %v306
  %432 = vmatpush.bf16.msra.mxu0 %v302
  %433 = vmatpush.bf16.msra.mxu0 %v298
  %434 = vmatmul.bf16.gmra.mxu0 %v102
  %v435 = vpop.f32.mrf.mxu0
  %v436 = vadd.f32 %v88, %v435
  %v437 = vpop.f32.mrf.mxu0
  %v438 = vadd.f32 %v88, %v437
  %439 = vdwg.mxu0
  %440 = vmatpush.bf16.msra.mxu0 %v358
  %441 = vmatpush.bf16.msra.mxu0 %v354
  %442 = vmatpush.bf16.msra.mxu0 %v350
  %443 = vmatpush.bf16.msra.mxu0 %v346
  %444 = vmatpush.bf16.msra.mxu0 %v342
  %445 = vmatpush.bf16.msra.mxu0 %v338
  %446 = vmatpush.bf16.msra.mxu0 %v334
  %447 = vmatpush.bf16.msra.mxu0 %v330
  %448 = vmatmul.bf16.gmra.mxu0 %v103
  %v449 = vpop.f32.mrf.mxu0
  %v450 = vadd.f32 %v436, %v449
  %v451 = vpop.f32.mrf.mxu0
  %v452 = vadd.f32 %v438, %v451
  %453 = vdwg.mxu0
  %454 = vmatpush.bf16.msra.mxu0 %v327
  %455 = vmatpush.bf16.msra.mxu0 %v323
  %456 = vmatpush.bf16.msra.mxu0 %v319
  %457 = vmatpush.bf16.msra.mxu0 %v315
  %458 = vmatpush.bf16.msra.mxu0 %v311
  %459 = vmatpush.bf16.msra.mxu0 %v307
  %460 = vmatpush.bf16.msra.mxu0 %v303
  %461 = vmatpush.bf16.msra.mxu0 %v299
  %462 = vmatmul.bf16.gmra.mxu0 %v102
  %v463 = vpop.f32.mrf.mxu0
  %v464 = vadd.f32 %v89, %v463
  %v465 = vpop.f32.mrf.mxu0
  %v466 = vadd.f32 %v89, %v465
  %467 = vdwg.mxu0
  %468 = vmatpush.bf16.msra.mxu0 %v359
  %469 = vmatpush.bf16.msra.mxu0 %v355
  %470 = vmatpush.bf16.msra.mxu0 %v351
  %471 = vmatpush.bf16.msra.mxu0 %v347
  %472 = vmatpush.bf16.msra.mxu0 %v343
  %473 = vmatpush.bf16.msra.mxu0 %v339
  %474 = vmatpush.bf16.msra.mxu0 %v335
  %475 = vmatpush.bf16.msra.mxu0 %v331
  %476 = vmatmul.bf16.gmra.mxu0 %v103
  %v477 = vpop.f32.mrf.mxu0
  %v478 = vadd.f32 %v464, %v477
  %v479 = vpop.f32.mrf.mxu0
  %v480 = vadd.f32 %v466, %v479
  %481 = vdwg.mxu0
  %482 = vmatpush.bf16.msra.mxu0 %v328
  %483 = vmatpush.bf16.msra.mxu0 %v324
  %484 = vmatpush.bf16.msra.mxu0 %v320
  %485 = vmatpush.bf16.msra.mxu0 %v316
  %486 = vmatpush.bf16.msra.mxu0 %v312
  %487 = vmatpush.bf16.msra.mxu0 %v308
  %488 = vmatpush.bf16.msra.mxu0 %v304
  %489 = vmatpush.bf16.msra.mxu0 %v300
  %490 = vmatmul.bf16.gmra.mxu0 %v102
  %v491 = vpop.f32.mrf.mxu0
  %v492 = vadd.f32 %v90, %v491
  %v493 = vpop.f32.mrf.mxu0
  %v494 = vadd.f32 %v90, %v493
  %495 = vdwg.mxu0
  %496 = vmatpush.bf16.msra.mxu0 %v360
  %497 = vmatpush.bf16.msra.mxu0 %v356
  %498 = vmatpush.bf16.msra.mxu0 %v352
  %499 = vmatpush.bf16.msra.mxu0 %v348
  %500 = vmatpush.bf16.msra.mxu0 %v344
  %501 = vmatpush.bf16.msra.mxu0 %v340
  %502 = vmatpush.bf16.msra.mxu0 %v336
  %503 = vmatpush.bf16.msra.mxu0 %v332
  %504 = vmatmul.bf16.gmra.mxu0 %v103
  %v505 = vpop.f32.mrf.mxu0
  %v506 = vadd.f32 %v492, %v505
  %v507 = vpop.f32.mrf.mxu0
  %v508 = vadd.f32 %v494, %v507
  %509 = vdwg.mxu0
  %510 = vmatpush.bf16.msra.mxu0 %v329
  %511 = vmatpush.bf16.msra.mxu0 %v325
  %512 = vmatpush.bf16.msra.mxu0 %v321
  %513 = vmatpush.bf16.msra.mxu0 %v317
  %514 = vmatpush.bf16.msra.mxu0 %v313
  %515 = vmatpush.bf16.msra.mxu0 %v309
  %516 = vmatpush.bf16.msra.mxu0 %v305
  %517 = vmatpush.bf16.msra.mxu0 %v301
  %518 = vmatmul.bf16.gmra.mxu0 %v102
  %v519 = vpop.f32.mrf.mxu0
  %v520 = vadd.f32 %v91, %v519
  %v521 = vpop.f32.mrf.mxu0
  %v522 = vadd.f32 %v91, %v521
  %523 = vdwg.mxu0
  %524 = vmatpush.bf16.msra.mxu0 %v361
  %525 = vmatpush.bf16.msra.mxu0 %v357
  %526 = vmatpush.bf16.msra.mxu0 %v353
  %527 = vmatpush.bf16.msra.mxu0 %v349
  %528 = vmatpush.bf16.msra.mxu0 %v345
  %529 = vmatpush.bf16.msra.mxu0 %v341
  %530 = vmatpush.bf16.msra.mxu0 %v337
  %531 = vmatpush.bf16.msra.mxu0 %v333
  %532 = vmatmul.bf16.gmra.mxu0 %v103
  %v533 = vpop.f32.mrf.mxu0
  %v534 = vadd.f32 %v520, %v533
  %v535 = vpop.f32.mrf.mxu0
  %v536 = vadd.f32 %v522, %v535
  %537 = vdwg.mxu0
  %v538 = vmax.f32 %v450, 0.0
  %v539 = vmax.f32 %v478, 0.0
  %v540 = vmax.f32 %v506, 0.0
  %v541 = vmax.f32 %v534, 0.0
  %v542 = vmax.f32 %v452, 0.0
  %v543 = vmax.f32 %v480, 0.0
  %v544 = vmax.f32 %v508, 0.0
  %v545 = vmax.f32 %v536, 0.0
  %v546 = vpack.c.bf16 %v542, %v538
  %v547 = vpack.c.bf16 %v543, %v539
  %v548 = vpack.c.bf16 %v544, %v540
  %v549 = vpack.c.bf16 %v545, %v541
  %v550 = vld [vmem:[%s3] sm:$0xf]
  %v551 = vld [vmem:[%s3 + $0x4] sm:$0xf]
  %v552 = vld [vmem:[%s3 + $0x8] sm:$0xf]
  %v553 = vld [vmem:[%s3 + $0xc] sm:$0xf]
  %v554 = vld [vmem:[%s3 + $0x10] sm:$0xf]
  %v555 = vld [vmem:[%s3 + $0x14] sm:$0xf]
  %v556 = vld [vmem:[%s3 + $0x18] sm:$0xf]
  %v557 = vld [vmem:[%s3 + $0x1c] sm:$0xf]
  %v558 = vld [vmem:[%s3 + $0x20] sm:$0xf]
  %v559 = vld [vmem:[%s3 + $0x24] sm:$0xf]
  %v560 = vld [vmem:[%s3 + $0x28] sm:$0xf]
  %v561 = vld [vmem:[%s3 + $0x2c] sm:$0xf]
  %v562 = vld [vmem:[%s3 + $0x30] sm:$0xf]
  %v563 = vld [vmem:[%s3 + $0x34] sm:$0xf]
  %v564 = vld [vmem:[%s3 + $0x38] sm:$0xf]
  %v565 = vld [vmem:[%s3 + $0x3c] sm:$0xf]
  %v566 = vld [vmem:[%s3 + $0x40] sm:$0xf]
  %v567 = vld [vmem:[%s3 + $0x44] sm:$0xf]
  %v568 = vld [vmem:[%s3 + $0x48] sm:$0xf]
  %v569 = vld [vmem:[%s3 + $0x4c] sm:$0xf]
  %v570 = vld [vmem:[%s3 + $0x50] sm:$0xf]
  %v571 = vld [vmem:[%s3 + $0x54] sm:$0xf]
  %v572 = vld [vmem:[%s3 + $0x58] sm:$0xf]
  %v573 = vld [vmem:[%s3 + $0x5c] sm:$0xf]
  %v574 = vld [vmem:[%s3 + $0x60] sm:$0xf]
  %v575 = vld [vmem:[%s3 + $0x64] sm:$0xf]
  %v576 = vld [vmem:[%s3 + $0x68] sm:$0xf]
  %v577 = vld [vmem:[%s3 + $0x6c] sm:$0xf]
  %v578 = vld [vmem:[%s3 + $0x70] sm:$0xf]
  %v579 = vld [vmem:[%s3 + $0x74] sm:$0xf]
  %v580 = vld [vmem:[%s3 + $0x78] sm:$0xf]
  %v581 = vld [vmem:[%s3 + $0x7c] sm:$0xf]
  %v582 = vld [vmem:[%s3 + $0x80] sm:$0xf]
  %v583 = vld [vmem:[%s3 + $0x84] sm:$0xf]
  %v584 = vld [vmem:[%s3 + $0x88] sm:$0xf]
  %v585 = vld [vmem:[%s3 + $0x8c] sm:$0xf]
  %v586 = vld [vmem:[%s3 + $0x90] sm:$0xf]
  %v587 = vld [vmem:[%s3 + $0x94] sm:$0xf]
  %v588 = vld [vmem:[%s3 + $0x98] sm:$0xf]
  %v589 = vld [vmem:[%s3 + $0x9c] sm:$0xf]
  %v590 = vld [vmem:[%s3 + $0xa0] sm:$0xf]
  %v591 = vld [vmem:[%s3 + $0xa4] sm:$0xf]
  %v592 = vld [vmem:[%s3 + $0xa8] sm:$0xf]
  %v593 = vld [vmem:[%s3 + $0xac] sm:$0xf]
  %v594 = vld [vmem:[%s3 + $0xb0] sm:$0xf]
  %v595 = vld [vmem:[%s3 + $0xb4] sm:$0xf]
  %v596 = vld [vmem:[%s3 + $0xb8] sm:$0xf]
  %v597 = vld [vmem:[%s3 + $0xbc] sm:$0xf]
  %v598 = vld [vmem:[%s3 + $0xc0] sm:$0xf]
  %v599 = vld [vmem:[%s3 + $0xc4] sm:$0xf]
  %v600 = vld [vmem:[%s3 + $0xc8] sm:$0xf]
  %v601 = vld [vmem:[%s3 + $0xcc] sm:$0xf]
  %v602 = vld [vmem:[%s3 + $0xd0] sm:$0xf]
  %v603 = vld [vmem:[%s3 + $0xd4] sm:$0xf]
  %v604 = vld [vmem:[%s3 + $0xd8] sm:$0xf]
  %v605 = vld [vmem:[%s3 + $0xdc] sm:$0xf]
  %v606 = vld [vmem:[%s3 + $0xe0] sm:$0xf]
  %v607 = vld [vmem:[%s3 + $0xe4] sm:$0xf]
  %v608 = vld [vmem:[%s3 + $0xe8] sm:$0xf]
  %v609 = vld [vmem:[%s3 + $0xec] sm:$0xf]
  %v610 = vld [vmem:[%s3 + $0xf0] sm:$0xf]
  %v611 = vld [vmem:[%s3 + $0xf4] sm:$0xf]
  %v612 = vld [vmem:[%s3 + $0xf8] sm:$0xf]
  %v613 = vld [vmem:[%s3 + $0xfc] sm:$0xf]
  %v614 = vld [vmem:[%s4] sm:$0x1]
  %v616 = vperm.slane %v614, 0
  %v682 = vunpack.c.l.b16 %v550
  %v683 = vunpack.c.l.b16 %v551
  %v684 = vunpack.c.l.b16 %v552
  %v685 = vunpack.c.l.b16 %v553
  %v686 = vunpack.c.l.b16 %v554
  %v687 = vunpack.c.l.b16 %v555
  %v688 = vunpack.c.l.b16 %v556
  %v689 = vunpack.c.l.b16 %v557
  %v690 = vunpack.c.l.b16 %v558
  %v691 = vunpack.c.l.b16 %v559
  %v692 = vunpack.c.l.b16 %v560
  %v693 = vunpack.c.l.b16 %v561
  %v694 = vunpack.c.l.b16 %v562
  %v695 = vunpack.c.l.b16 %v563
  %v696 = vunpack.c.l.b16 %v564
  %v697 = vunpack.c.l.b16 %v565
  %v698 = vunpack.c.l.b16 %v566
  %v699 = vunpack.c.l.b16 %v567
  %v700 = vunpack.c.l.b16 %v568
  %v701 = vunpack.c.l.b16 %v569
  %v702 = vunpack.c.l.b16 %v570
  %v703 = vunpack.c.l.b16 %v571
  %v704 = vunpack.c.l.b16 %v572
  %v705 = vunpack.c.l.b16 %v573
  %v706 = vunpack.c.l.b16 %v574
  %v707 = vunpack.c.l.b16 %v575
  %v708 = vunpack.c.l.b16 %v576
  %v709 = vunpack.c.l.b16 %v577
  %v710 = vunpack.c.l.b16 %v578
  %v711 = vunpack.c.l.b16 %v579
  %v712 = vunpack.c.l.b16 %v580
  %v713 = vunpack.c.l.b16 %v581
  %v714 = vunpack.c.l.b16 %v582
  %v715 = vunpack.c.l.b16 %v583
  %v716 = vunpack.c.l.b16 %v584
  %v717 = vunpack.c.l.b16 %v585
  %v718 = vunpack.c.l.b16 %v586
  %v719 = vunpack.c.l.b16 %v587
  %v720 = vunpack.c.l.b16 %v588
  %v721 = vunpack.c.l.b16 %v589
  %v722 = vunpack.c.l.b16 %v590
  %v723 = vunpack.c.l.b16 %v591
  %v724 = vunpack.c.l.b16 %v592
  %v725 = vunpack.c.l.b16 %v593
  %v726 = vunpack.c.l.b16 %v594
  %v727 = vunpack.c.l.b16 %v595
  %v728 = vunpack.c.l.b16 %v596
  %v729 = vunpack.c.l.b16 %v597
  %v730 = vunpack.c.l.b16 %v598
  %v731 = vunpack.c.l.b16 %v599
  %v732 = vunpack.c.l.b16 %v600
  %v733 = vunpack.c.l.b16 %v601
  %v734 = vunpack.c.l.b16 %v602
  %v735 = vunpack.c.l.b16 %v603
  %v736 = vunpack.c.l.b16 %v604
  %v737 = vunpack.c.l.b16 %v605
  %v738 = vunpack.c.l.b16 %v606
  %v739 = vunpack.c.l.b16 %v607
  %v740 = vunpack.c.l.b16 %v608
  %v741 = vunpack.c.l.b16 %v609
  %v742 = vunpack.c.l.b16 %v610
  %v743 = vunpack.c.l.b16 %v611
  %v744 = vunpack.c.l.b16 %v612
  %v745 = vunpack.c.l.b16 %v613
  %v746 = vpack.c.b16 %v683, %v682
  %v747 = vpack.c.b16 %v685, %v684
  %v748 = vpack.c.b16 %v687, %v686
  %v749 = vpack.c.b16 %v689, %v688
  %v750 = vpack.c.b16 %v691, %v690
  %v751 = vpack.c.b16 %v693, %v692
  %v752 = vpack.c.b16 %v695, %v694
  %v753 = vpack.c.b16 %v697, %v696
  %v754 = vpack.c.b16 %v699, %v698
  %v755 = vpack.c.b16 %v701, %v700
  %v756 = vpack.c.b16 %v703, %v702
  %v757 = vpack.c.b16 %v705, %v704
  %v758 = vpack.c.b16 %v707, %v706
  %v759 = vpack.c.b16 %v709, %v708
  %v760 = vpack.c.b16 %v711, %v710
  %v761 = vpack.c.b16 %v713, %v712
  %v762 = vpack.c.b16 %v715, %v714
  %v763 = vpack.c.b16 %v717, %v716
  %v764 = vpack.c.b16 %v719, %v718
  %v765 = vpack.c.b16 %v721, %v720
  %v766 = vpack.c.b16 %v723, %v722
  %v767 = vpack.c.b16 %v725, %v724
  %v768 = vpack.c.b16 %v727, %v726
  %v769 = vpack.c.b16 %v729, %v728
  %v770 = vpack.c.b16 %v731, %v730
  %v771 = vpack.c.b16 %v733, %v732
  %v772 = vpack.c.b16 %v735, %v734
  %v773 = vpack.c.b16 %v737, %v736
  %v774 = vpack.c.b16 %v739, %v738
  %v775 = vpack.c.b16 %v741, %v740
  %v776 = vpack.c.b16 %v743, %v742
  %v777 = vpack.c.b16 %v745, %v744
  %810 = vmatpush.bf16.msra.mxu0 %v753
  %811 = vmatpush.bf16.msra.mxu0 %v752
  %812 = vmatpush.bf16.msra.mxu0 %v751
  %813 = vmatpush.bf16.msra.mxu0 %v750
  %814 = vmatpush.bf16.msra.mxu0 %v749
  %815 = vmatpush.bf16.msra.mxu0 %v748
  %816 = vmatpush.bf16.msra.mxu0 %v747
  %817 = vmatpush.bf16.msra.mxu0 %v746
  %818 = vmatmul.bf16.gmra.mxu0 %v546
  %v819 = vpop.f32.mrf.mxu0
  %v820 = vadd.f32 %v616, %v819
  %v821 = vpop.f32.mrf.mxu0
  %v822 = vadd.f32 %v616, %v821
  %823 = vdwg.mxu0
  %824 = vmatpush.bf16.msra.mxu0 %v761
  %825 = vmatpush.bf16.msra.mxu0 %v760
  %826 = vmatpush.bf16.msra.mxu0 %v759
  %827 = vmatpush.bf16.msra.mxu0 %v758
  %828 = vmatpush.bf16.msra.mxu0 %v757
  %829 = vmatpush.bf16.msra.mxu0 %v756
  %830 = vmatpush.bf16.msra.mxu0 %v755
  %831 = vmatpush.bf16.msra.mxu0 %v754
  %832 = vmatmul.bf16.gmra.mxu0 %v547
  %v833 = vpop.f32.mrf.mxu0
  %v834 = vadd.f32 %v820, %v833
  %v835 = vpop.f32.mrf.mxu0
  %v836 = vadd.f32 %v822, %v835
  %837 = vdwg.mxu0
  %838 = vmatpush.bf16.msra.mxu0 %v769
  %839 = vmatpush.bf16.msra.mxu0 %v768
  %840 = vmatpush.bf16.msra.mxu0 %v767
  %841 = vmatpush.bf16.msra.mxu0 %v766
  %842 = vmatpush.bf16.msra.mxu0 %v765
  %843 = vmatpush.bf16.msra.mxu0 %v764
  %844 = vmatpush.bf16.msra.mxu0 %v763
  %845 = vmatpush.bf16.msra.mxu0 %v762
  %846 = vmatmul.bf16.gmra.mxu0 %v548
  %v847 = vpop.f32.mrf.mxu0
  %v848 = vadd.f32 %v834, %v847
  %v849 = vpop.f32.mrf.mxu0
  %v850 = vadd.f32 %v836, %v849
  %851 = vdwg.mxu0
  %852 = vmatpush.bf16.msra.mxu0 %v777
  %853 = vmatpush.bf16.msra.mxu0 %v776
  %854 = vmatpush.bf16.msra.mxu0 %v775
  %855 = vmatpush.bf16.msra.mxu0 %v774
  %856 = vmatpush.bf16.msra.mxu0 %v773
  %857 = vmatpush.bf16.msra.mxu0 %v772
  %858 = vmatpush.bf16.msra.mxu0 %v771
  %859 = vmatpush.bf16.msra.mxu0 %v770
  %860 = vmatmul.bf16.gmra.mxu0 %v549
  %v861 = vpop.f32.mrf.mxu0
  %v862 = vadd.f32 %v848, %v861
  %v863 = vpop.f32.mrf.mxu0
  %v864 = vadd.f32 %v850, %v863
  %865 = vdwg.mxu0
  %866 = vst [vmem:[%s5] sm:$0xff] %v862
  %867 = vst [vmem:[%s5 + $0x8] sm:$0xff] %v864
  // Predicated region
  $region22: #{dqn_forward.7} parent=0 // pred_check
    _
  $region23: #{dqn_forward.7} parent=0 // pred_check_branch
    %869 = sbr.rel (0) target = $region25
  $region24: #{dqn_forward.7} parent=0 // pred_region
    _
  $region25: #{dqn_forward.7} parent=0 // pred_fallthru
    _
  // Predicated region
  $region26: #{dqn_forward.7} parent=0 // pred_check
    _
  $region27: #{dqn_forward.7} parent=0 // pred_check_branch
    %871 = sbr.rel (0) target = $region29
  $region28: #{dqn_forward.7} parent=0 // pred_region
    _
  $region29: #{dqn_forward.7} parent=0 // pred_fallthru
    _

</llo_original>
